<compile_context>
chip_gen: v5e
topology: v5e:2x2
jax: 0.10.0
libtpu: 0.0.40
codegen_flags: <defaults>
</compile_context>

<pallas_src>
import functools

import jax
import jax.numpy as jnp
from jax import lax
from jax.experimental import pallas as pl
from jax.experimental.pallas import tpu as pltpu


# ------------------------------ Fused Pallas kernel ------------------------------

def _fused_block_kernel(*refs, stride, H, W, Ho, Wo, has_expand):
    """One batch image per grid step: expand(1x1) -> DW(3x3) -> project(1x1), all in VMEM."""
    if has_expand:
        (x_ref, w1_ref, b1_ref, w9_ref, b2_ref, w3_ref, b3_ref,
         o_ref, hid_ref) = refs
    else:
        x_ref, w9_ref, b2_ref, w3_ref, b3_ref, o_ref, hid_ref = refs
        w1_ref = b1_ref = None

    Hp, Wp, Chid = hid_ref.shape           # padded hidden scratch (H+2, W+2, Chid)
    Cout = o_ref.shape[-1]

    # ---- Stage 1: 1x1 expand conv (+ folded BN scale, bias, ReLU6).
    x = x_ref[...].astype(jnp.float32)     # (H, W, Cin)
    if has_expand:
        Cin = x.shape[-1]
        h = jnp.dot(x.reshape(H * W, Cin), w1_ref[...],
                    preferred_element_type=jnp.float32)
        h = jnp.clip(h + b1_ref[...], 0.0, 6.0).reshape(H, W, Chid)
    else:
        h = x

    # Zero ONLY the 1-px pad border of the scratch; the interior is fully overwritten
    # below.  Re-done every grid step so megacore ("parallel") sharding stays safe.
    zrow = jnp.zeros((1, Wp, Chid), jnp.float32)
    zcol = jnp.zeros((Hp, 1, Chid), jnp.float32)
    hid_ref[0:1, :, :] = zrow
    hid_ref[H + 1:H + 2, :, :] = zrow
    hid_ref[:, 0:1, :] = zcol
    hid_ref[:, W + 1:W + 2, :] = zcol
    hid_ref[1:H + 1, 1:W + 1, :] = h                # interior

    # ---- Stage 2: 3x3 depthwise conv (+ folded BN, ReLU6), entirely in VMEM.
    xp = hid_ref[...]                               # (Hp, Wp, Chid)
    w9 = w9_ref[...].astype(jnp.float32)            # (9, Chid), BN scale folded in
    # Start the accumulator at the folded BN bias (saves a full-tile add later).
    acc = jnp.broadcast_to(b2_ref[...].reshape(1, 1, Chid), (Ho, Wo, Chid))

    if stride == 1:
        # Hoist the sublane (column) shift: 3 shifted views; taps are row offsets only.
        for kw in range(3):
            col = xp[:, kw:kw + Wo, :]              # (Hp, Wo, Chid)
            for kh in range(3):
                acc = acc + col[kh:kh + Ho] * w9[3 * kh + kw]
    else:  # stride == 2
        # De-interleave even/odd columns ONCE; all remaining slices are unit-stride
        # along the sublane (W) axis, only the cheap leading (H) axis is strided.
        ev = xp[:, 0:2 * Wo + 1:2, :]               # (Hp, Wo + 1, Chid)
        od = xp[:, 1:2 * Wo:2, :]                   # (Hp, Wo, Chid)
        for kh in range(3):
            rev = ev[kh:kh + 2 * (Ho - 1) + 1:2]    # (Ho, Wo + 1, Chid)
            rod = od[kh:kh + 2 * (Ho - 1) + 1:2]    # (Ho, Wo, Chid)
            acc = acc + rev[:, 0:Wo, :] * w9[3 * kh + 0]
            acc = acc + rod * w9[3 * kh + 1]
            acc = acc + rev[:, 1:Wo + 1, :] * w9[3 * kh + 2]

    dw = jnp.clip(acc, 0.0, 6.0)                    # (Ho, Wo, Chid)

    # ---- Stage 3: 1x1 project conv (+ folded BN, ReLU6) -> output block.
    out = jnp.dot(dw.reshape(Ho * Wo, Chid), w3_ref[...],
                  preferred_element_type=jnp.float32)
    out = jnp.clip(out + b3_ref[...], 0.0, 6.0)
    o_ref[...] = out.reshape(Ho, Wo, Cout).astype(o_ref.dtype)


def fused_block(x_nhwc, params, stride, expand_ratio,
                *, vmem_limit_bytes=48 * 1024 * 1024):
    """x: (N, H, W, Cin) f32 -> (N, Ho, Wo, Cout) f32. Single fused pallas_call."""
    N, H, W, Cin = x_nhwc.shape
    Ho = (H + 2 - 3) // stride + 1
    Wo = (W + 2 - 3) // stride + 1
    has_expand = expand_ratio != 1

    wd, s2, b2 = params["dw"]
    Chid = wd.shape[-1]
    w9 = (wd * s2[None, None, :]).reshape(9, Chid)      # fold BN scale, flat (9, C)
    w3, s3, b3 = params["project"]
    Cout = w3.shape[1]
    w3f = w3 * s3[None, :]                              # fold BN scale

    args = [x_nhwc]
    in_specs = [pl.BlockSpec((None, H, W, Cin), lambda n: (n, 0, 0, 0))]
    if has_expand:
        w1, s1, b1 = params["expand"]
        w1f = w1 * s1[None, :]                          # fold BN scale
        args += [w1f, b1.reshape(1, Chid)]
        in_specs += [pl.BlockSpec((Cin, Chid), lambda n: (0, 0)),
                     pl.BlockSpec((1, Chid), lambda n: (0, 0))]
    args += [w9, b2.reshape(1, Chid), w3f, b3.reshape(1, Cout)]
    in_specs += [pl.BlockSpec((9, Chid), lambda n: (0, 0)),
                 pl.BlockSpec((1, Chid), lambda n: (0, 0)),
                 pl.BlockSpec((Chid, Cout), lambda n: (0, 0)),
                 pl.BlockSpec((1, Cout), lambda n: (0, 0))]

    kernel = functools.partial(_fused_block_kernel, stride=stride, H=H, W=W,
                               Ho=Ho, Wo=Wo, has_expand=has_expand)
    return pl.pallas_call(
        kernel,
        out_shape=jax.ShapeDtypeStruct((N, Ho, Wo, Cout), jnp.float32),
        grid_spec=pltpu.PrefetchScalarGridSpec(
            num_scalar_prefetch=0,
            grid=(N,),
            in_specs=in_specs,
            out_specs=pl.BlockSpec((None, Ho, Wo, Cout), lambda n: (n, 0, 0, 0)),
            scratch_shapes=[pltpu.VMEM((H + 2, W + 2, Chid), jnp.float32)],
        ),
        compiler_params=pltpu.CompilerParams(
            dimension_semantics=("parallel",),
            vmem_limit_bytes=vmem_limit_bytes),
    )(*args)


# --------------------------- Parameters / BN folding ----------------------------

def _fold_bn(gamma, beta, mean, var, eps=1e-5):
    scale = gamma * lax.rsqrt(var + eps)
    bias = beta - mean * scale
    return scale, bias


def init_block_params(key, inp, oup, expand_ratio):
    hidden = int(round(inp * expand_ratio))
    keys = jax.random.split(key, 16)

    def bn(k, c):
        kg, kb, km, kv = jax.random.split(k, 4)
        gamma = jax.random.uniform(kg, (c,), jnp.float32, 0.5, 1.5)
        beta = jax.random.normal(kb, (c,), jnp.float32) * 0.1
        mean = jax.random.normal(km, (c,), jnp.float32) * 0.1
        var = jax.random.uniform(kv, (c,), jnp.float32, 0.5, 1.5)
        return _fold_bn(gamma, beta, mean, var)

    params = {}
    if expand_ratio != 1:
        w1 = jax.random.normal(keys[0], (inp, hidden), jnp.float32) * 0.2
        s1, b1 = bn(keys[1], hidden)
        params["expand"] = (w1, s1, b1)
    wd = jax.random.normal(keys[2], (3, 3, hidden), jnp.float32) * 0.2
    s2, b2 = bn(keys[3], hidden)
    params["dw"] = (wd, s2, b2)
    w3 = jax.random.normal(keys[4], (hidden, oup), jnp.float32) * 0.2
    s3, b3 = bn(keys[5], oup)
    params["project"] = (w3, s3, b3)
    return params


# -------------------------------- Block forward ---------------------------------

def block_forward(params, x_nchw, stride, expand_ratio):
    assert stride in (1, 2)
    x = jnp.transpose(x_nchw, (0, 2, 3, 1)).astype(jnp.float32)   # NCHW -> NHWC
    y = fused_block(x, params, stride, expand_ratio)
    return jnp.transpose(y, (0, 3, 1, 2))                         # NHWC -> NCHW


# ------------------------------ Pure-JAX reference -------------------------------

def block_reference(params, x_nchw, stride, expand_ratio):
    def bn_relu6(y, s, b):
        return jnp.clip(y * s.reshape(1, -1, 1, 1) + b.reshape(1, -1, 1, 1), 0.0, 6.0)

    x = x_nchw.astype(jnp.float32)
    if expand_ratio != 1:
        w1, s1, b1 = params["expand"]
        k1 = w1.T.reshape(w1.shape[1], w1.shape[0], 1, 1)
        x = lax.conv_general_dilated(x, k1, (1, 1), "VALID",
                                     dimension_numbers=("NCHW", "OIHW", "NCHW"))
        x = bn_relu6(x, s1, b1)
    wd, s2, b2 = params["dw"]
    C = wd.shape[-1]
    kdw = jnp.transpose(wd, (2, 0, 1)).reshape(C, 1, 3, 3)
    x = lax.conv_general_dilated(x, kdw, (stride, stride), ((1, 1), (1, 1)),
                                 dimension_numbers=("NCHW", "OIHW", "NCHW"),
                                 feature_group_count=C)
    x = bn_relu6(x, s2, b2)
    w3, s3, b3 = params["project"]
    k3 = w3.T.reshape(w3.shape[1], w3.shape[0], 1, 1)
    x = lax.conv_general_dilated(x, k3, (1, 1), "VALID",
                                 dimension_numbers=("NCHW", "OIHW", "NCHW"))
    x = bn_relu6(x, s3, b3)
    return x


# ------------------------------------- Main --------------------------------------

if __name__ == "__main__":
    inp, oup, stride, expand_ratio = 8, 8, 1, 4   # hidden_dim = 32
    N, H, W = 2, 16, 16

    key = jax.random.PRNGKey(0)
    kx, kp = jax.random.split(key)
    x = jax.random.normal(kx, (N, inp, H, W), jnp.float32)   # NCHW, like PyTorch
    params = init_block_params(kp, inp, oup, expand_ratio)

    # expand_ratio=4, stride=1
    out = jax.block_until_ready(block_forward(params, x, stride, expand_ratio))
    ref = block_reference(params, x, stride, expand_ratio)
    assert out.shape == ref.shape, (out.shape, ref.shape)
    assert bool(jnp.allclose(out, ref, atol=1e-4, rtol=1e-4)), "mismatch vs reference"

    # expand_ratio=4, stride=2 (even/odd column de-interleave path)
    out2 = jax.block_until_ready(block_forward(params, x, 2, expand_ratio))
    ref2 = block_reference(params, x, 2, expand_ratio)
    assert out2.shape == ref2.shape, (out2.shape, ref2.shape)
    assert bool(jnp.allclose(out2, ref2, atol=1e-4, rtol=1e-4)), "stride-2 mismatch"

    # expand_ratio=1 (no expand stage) — exercises the has_expand=False branch.
    params1 = init_block_params(kp, inp, oup, 1)
    out3 = jax.block_until_ready(block_forward(params1, x, 1, 1))
    ref3 = block_reference(params1, x, 1, 1)
    assert out3.shape == ref3.shape, (out3.shape, ref3.shape)
    assert bool(jnp.allclose(out3, ref3, atol=1e-4, rtol=1e-4)), "expand=1 mismatch"

    print("KERNEL_OK")
</pallas_src>

<mosaic_0001>
module attributes {stable_mosaic.version = 11 : i64} {
  func.func @_fused_block_kernel(%arg0: i32, %arg1: memref<1x16x16x8xf32, #tpu.memory_space<vmem>>, %arg2: memref<8x32xf32, #tpu.memory_space<vmem>>, %arg3: memref<1x32xf32, #tpu.memory_space<vmem>>, %arg4: memref<9x32xf32, #tpu.memory_space<vmem>>, %arg5: memref<1x32xf32, #tpu.memory_space<vmem>>, %arg6: memref<32x8xf32, #tpu.memory_space<vmem>>, %arg7: memref<1x8xf32, #tpu.memory_space<vmem>>, %arg8: memref<1x16x16x8xf32, #tpu.memory_space<vmem>>, %arg9: memref<18x18x32xf32, #tpu.memory_space<vmem>>) attributes {dimension_semantics = [#tpu.dimension_semantics<parallel>], iteration_bounds = array<i64: 2>, scalar_prefetch = 0 : i64, scratch_operands = 1 : i64, tpu.core_type = #tpu.core_type<tc>, window_params = [{transform_indices = @transform_0, window_bounds = array<i64: 1, 16, 16, 8>}, {pipeline_mode = #tpu.pipeline_mode<synchronous>, transform_indices = @transform_1, window_bounds = array<i64: 8, 32>}, {pipeline_mode = #tpu.pipeline_mode<synchronous>, transform_indices = @transform_2, window_bounds = array<i64: 1, 32>}, {pipeline_mode = #tpu.pipeline_mode<synchronous>, transform_indices = @transform_3, window_bounds = array<i64: 9, 32>}, {pipeline_mode = #tpu.pipeline_mode<synchronous>, transform_indices = @transform_4, window_bounds = array<i64: 1, 32>}, {pipeline_mode = #tpu.pipeline_mode<synchronous>, transform_indices = @transform_5, window_bounds = array<i64: 32, 8>}, {pipeline_mode = #tpu.pipeline_mode<synchronous>, transform_indices = @transform_6, window_bounds = array<i64: 1, 8>}, {transform_indices = @transform_7, window_bounds = array<i64: 1, 16, 16, 8>}]} {
    %c0 = arith.constant 0 : index
    %c0_0 = arith.constant 0 : index
    %c0_1 = arith.constant 0 : index
    %c0_2 = arith.constant 0 : index
    %0 = vector.load %arg1[%c0, %c0_0, %c0_1, %c0_2] : memref<1x16x16x8xf32, #tpu.memory_space<vmem>>, vector<1x16x16x8xf32>
    %1 = vector.shape_cast %0 : vector<1x16x16x8xf32> to vector<16x16x8xf32>
    %2 = vector.shape_cast %1 : vector<16x16x8xf32> to vector<256x8xf32>
    %c0_3 = arith.constant 0 : index
    %c0_4 = arith.constant 0 : index
    %3 = vector.load %arg2[%c0_3, %c0_4] : memref<8x32xf32, #tpu.memory_space<vmem>>, vector<8x32xf32>
    %cst = arith.constant dense<0.000000e+00> : vector<256x32xf32>
    %4 = tpu.matmul %2, %3, %cst {dimension_numbers = #tpu.dot_dimension_numbers<[1], [0], [0], [1], [0, 0, 1, 1], [], []>} : vector<256x8xf32>, vector<8x32xf32>, vector<256x32xf32> -> vector<256x32xf32>
    %c0_5 = arith.constant 0 : index
    %c0_6 = arith.constant 0 : index
    %5 = vector.load %arg3[%c0_5, %c0_6] : memref<1x32xf32, #tpu.memory_space<vmem>>, vector<1x32xf32>
    %6 = vector.broadcast %5 : vector<1x32xf32> to vector<256x32xf32>
    %7 = arith.addf %4, %6 : vector<256x32xf32>
    %cst_7 = arith.constant 0.000000e+00 : f32
    %cst_8 = arith.constant 6.000000e+00 : f32
    %8 = vector.broadcast %cst_7 : f32 to vector<256x32xf32>
    %9 = arith.maximumf %8, %7 : vector<256x32xf32>
    %10 = vector.broadcast %cst_8 : f32 to vector<256x32xf32>
    %11 = arith.minimumf %10, %9 : vector<256x32xf32>
    %12 = vector.shape_cast %11 : vector<256x32xf32> to vector<16x16x32xf32>
    %cst_9 = arith.constant 0.000000e+00 : f32
    %13 = vector.broadcast %cst_9 : f32 to vector<1x18x32xf32>
    %cst_10 = arith.constant 0.000000e+00 : f32
    %14 = vector.broadcast %cst_10 : f32 to vector<18x1x32xf32>
    %c0_11 = arith.constant 0 : index
    %c0_12 = arith.constant 0 : index
    %c0_13 = arith.constant 0 : index
    %15 = vector.load %arg9[%c0_11, %c0_12, %c0_13] : memref<18x18x32xf32, #tpu.memory_space<vmem>>, vector<1x18x32xf32>
    tpu.vector_store %arg9[%c0_11, %c0_12, %c0_13], %13 {strides = array<i32>} : memref<18x18x32xf32, #tpu.memory_space<vmem>>, vector<1x18x32xf32>,
    %c17 = arith.constant 17 : index
    %c0_14 = arith.constant 0 : index
    %c0_15 = arith.constant 0 : index
    %16 = vector.load %arg9[%c17, %c0_14, %c0_15] : memref<18x18x32xf32, #tpu.memory_space<vmem>>, vector<1x18x32xf32>
    tpu.vector_store %arg9[%c17, %c0_14, %c0_15], %13 {strides = array<i32>} : memref<18x18x32xf32, #tpu.memory_space<vmem>>, vector<1x18x32xf32>,
    %c0_16 = arith.constant 0 : index
    %c0_17 = arith.constant 0 : index
    %c0_18 = arith.constant 0 : index
    %17 = vector.load %arg9[%c0_16, %c0_17, %c0_18] : memref<18x18x32xf32, #tpu.memory_space<vmem>>, vector<18x1x32xf32>
    tpu.vector_store %arg9[%c0_16, %c0_17, %c0_18], %14 {strides = array<i32>} : memref<18x18x32xf32, #tpu.memory_space<vmem>>, vector<18x1x32xf32>,
    %c0_19 = arith.constant 0 : index
    %c17_20 = arith.constant 17 : index
    %c0_21 = arith.constant 0 : index
    %18 = vector.load %arg9[%c0_19, %c17_20, %c0_21] : memref<18x18x32xf32, #tpu.memory_space<vmem>>, vector<18x1x32xf32>
    tpu.vector_store %arg9[%c0_19, %c17_20, %c0_21], %14 {strides = array<i32>} : memref<18x18x32xf32, #tpu.memory_space<vmem>>, vector<18x1x32xf32>,
    %c1 = arith.constant 1 : index
    %c1_22 = arith.constant 1 : index
    %c0_23 = arith.constant 0 : index
    %19 = vector.load %arg9[%c1, %c1_22, %c0_23] : memref<18x18x32xf32, #tpu.memory_space<vmem>>, vector<16x16x32xf32>
    tpu.vector_store %arg9[%c1, %c1_22, %c0_23], %12 {strides = array<i32>} : memref<18x18x32xf32, #tpu.memory_space<vmem>>, vector<16x16x32xf32>,
    %c0_24 = arith.constant 0 : index
    %c0_25 = arith.constant 0 : index
    %c0_26 = arith.constant 0 : index
    %20 = vector.load %arg9[%c0_24, %c0_25, %c0_26] : memref<18x18x32xf32, #tpu.memory_space<vmem>>, vector<18x18x32xf32>
    %c0_27 = arith.constant 0 : index
    %c0_28 = arith.constant 0 : index
    %21 = vector.load %arg4[%c0_27, %c0_28] : memref<9x32xf32, #tpu.memory_space<vmem>>, vector<9x32xf32>
    %c0_29 = arith.constant 0 : index
    %c0_30 = arith.constant 0 : index
    %22 = vector.load %arg5[%c0_29, %c0_30] : memref<1x32xf32, #tpu.memory_space<vmem>>, vector<1x32xf32>
    %23 = vector.shape_cast %22 : vector<1x32xf32> to vector<1x1x32xf32>
    %24 = vector.shape_cast %23 : vector<1x1x32xf32> to vector<1x1x32xf32>
    %25 = vector.broadcast %24 : vector<1x1x32xf32> to vector<16x16x32xf32>
    %26 = vector.extract_strided_slice %20 {offsets = [0, 0, 0], sizes = [18, 16, 32], strides = [1, 1, 1]} : vector<18x18x32xf32> to vector<18x16x32xf32>
    %27 = vector.extract_strided_slice %26 {offsets = [0, 0, 0], sizes = [16, 16, 32], strides = [1, 1, 1]} : vector<18x16x32xf32> to vector<16x16x32xf32>
    %28 = vector.extract_strided_slice %21 {offsets = [0, 0], sizes = [1, 32], strides = [1, 1]} : vector<9x32xf32> to vector<1x32xf32>
    %29 = vector.shape_cast %28 : vector<1x32xf32> to vector<32xf32>
    %30 = vector.shape_cast %29 : vector<32xf32> to vector<1x1x32xf32>
    %31 = vector.broadcast %30 : vector<1x1x32xf32> to vector<16x16x32xf32>
    %32 = arith.mulf %27, %31 : vector<16x16x32xf32>
    %33 = arith.addf %25, %32 : vector<16x16x32xf32>
    %34 = vector.extract_strided_slice %26 {offsets = [1, 0, 0], sizes = [16, 16, 32], strides = [1, 1, 1]} : vector<18x16x32xf32> to vector<16x16x32xf32>
    %35 = vector.extract_strided_slice %21 {offsets = [3, 0], sizes = [1, 32], strides = [1, 1]} : vector<9x32xf32> to vector<1x32xf32>
    %36 = vector.shape_cast %35 : vector<1x32xf32> to vector<32xf32>
    %37 = vector.shape_cast %36 : vector<32xf32> to vector<1x1x32xf32>
    %38 = vector.broadcast %37 : vector<1x1x32xf32> to vector<16x16x32xf32>
    %39 = arith.mulf %34, %38 : vector<16x16x32xf32>
    %40 = arith.addf %33, %39 : vector<16x16x32xf32>
    %41 = vector.extract_strided_slice %26 {offsets = [2, 0, 0], sizes = [16, 16, 32], strides = [1, 1, 1]} : vector<18x16x32xf32> to vector<16x16x32xf32>
    %42 = vector.extract_strided_slice %21 {offsets = [6, 0], sizes = [1, 32], strides = [1, 1]} : vector<9x32xf32> to vector<1x32xf32>
    %43 = vector.shape_cast %42 : vector<1x32xf32> to vector<32xf32>
    %44 = vector.shape_cast %43 : vector<32xf32> to vector<1x1x32xf32>
    %45 = vector.broadcast %44 : vector<1x1x32xf32> to vector<16x16x32xf32>
    %46 = arith.mulf %41, %45 : vector<16x16x32xf32>
    %47 = arith.addf %40, %46 : vector<16x16x32xf32>
    %48 = vector.extract_strided_slice %20 {offsets = [0, 1, 0], sizes = [18, 16, 32], strides = [1, 1, 1]} : vector<18x18x32xf32> to vector<18x16x32xf32>
    %49 = vector.extract_strided_slice %48 {offsets = [0, 0, 0], sizes = [16, 16, 32], strides = [1, 1, 1]} : vector<18x16x32xf32> to vector<16x16x32xf32>
    %50 = vector.extract_strided_slice %21 {offsets = [1, 0], sizes = [1, 32], strides = [1, 1]} : vector<9x32xf32> to vector<1x32xf32>
    %51 = vector.shape_cast %50 : vector<1x32xf32> to vector<32xf32>
    %52 = vector.shape_cast %51 : vector<32xf32> to vector<1x1x32xf32>
    %53 = vector.broadcast %52 : vector<1x1x32xf32> to vector<16x16x32xf32>
    %54 = arith.mulf %49, %53 : vector<16x16x32xf32>
    %55 = arith.addf %47, %54 : vector<16x16x32xf32>
    %56 = vector.extract_strided_slice %48 {offsets = [1, 0, 0], sizes = [16, 16, 32], strides = [1, 1, 1]} : vector<18x16x32xf32> to vector<16x16x32xf32>
    %57 = vector.extract_strided_slice %21 {offsets = [4, 0], sizes = [1, 32], strides = [1, 1]} : vector<9x32xf32> to vector<1x32xf32>
    %58 = vector.shape_cast %57 : vector<1x32xf32> to vector<32xf32>
    %59 = vector.shape_cast %58 : vector<32xf32> to vector<1x1x32xf32>
    %60 = vector.broadcast %59 : vector<1x1x32xf32> to vector<16x16x32xf32>
    %61 = arith.mulf %56, %60 : vector<16x16x32xf32>
    %62 = arith.addf %55, %61 : vector<16x16x32xf32>
    %63 = vector.extract_strided_slice %48 {offsets = [2, 0, 0], sizes = [16, 16, 32], strides = [1, 1, 1]} : vector<18x16x32xf32> to vector<16x16x32xf32>
    %64 = vector.extract_strided_slice %21 {offsets = [7, 0], sizes = [1, 32], strides = [1, 1]} : vector<9x32xf32> to vector<1x32xf32>
    %65 = vector.shape_cast %64 : vector<1x32xf32> to vector<32xf32>
    %66 = vector.shape_cast %65 : vector<32xf32> to vector<1x1x32xf32>
    %67 = vector.broadcast %66 : vector<1x1x32xf32> to vector<16x16x32xf32>
    %68 = arith.mulf %63, %67 : vector<16x16x32xf32>
    %69 = arith.addf %62, %68 : vector<16x16x32xf32>
    %70 = vector.extract_strided_slice %20 {offsets = [0, 2, 0], sizes = [18, 16, 32], strides = [1, 1, 1]} : vector<18x18x32xf32> to vector<18x16x32xf32>
    %71 = vector.extract_strided_slice %70 {offsets = [0, 0, 0], sizes = [16, 16, 32], strides = [1, 1, 1]} : vector<18x16x32xf32> to vector<16x16x32xf32>
    %72 = vector.extract_strided_slice %21 {offsets = [2, 0], sizes = [1, 32], strides = [1, 1]} : vector<9x32xf32> to vector<1x32xf32>
    %73 = vector.shape_cast %72 : vector<1x32xf32> to vector<32xf32>
    %74 = vector.shape_cast %73 : vector<32xf32> to vector<1x1x32xf32>
    %75 = vector.broadcast %74 : vector<1x1x32xf32> to vector<16x16x32xf32>
    %76 = arith.mulf %71, %75 : vector<16x16x32xf32>
    %77 = arith.addf %69, %76 : vector<16x16x32xf32>
    %78 = vector.extract_strided_slice %70 {offsets = [1, 0, 0], sizes = [16, 16, 32], strides = [1, 1, 1]} : vector<18x16x32xf32> to vector<16x16x32xf32>
    %79 = vector.extract_strided_slice %21 {offsets = [5, 0], sizes = [1, 32], strides = [1, 1]} : vector<9x32xf32> to vector<1x32xf32>
    %80 = vector.shape_cast %79 : vector<1x32xf32> to vector<32xf32>
    %81 = vector.shape_cast %80 : vector<32xf32> to vector<1x1x32xf32>
    %82 = vector.broadcast %81 : vector<1x1x32xf32> to vector<16x16x32xf32>
    %83 = arith.mulf %78, %82 : vector<16x16x32xf32>
    %84 = arith.addf %77, %83 : vector<16x16x32xf32>
    %85 = vector.extract_strided_slice %70 {offsets = [2, 0, 0], sizes = [16, 16, 32], strides = [1, 1, 1]} : vector<18x16x32xf32> to vector<16x16x32xf32>
    %86 = vector.extract_strided_slice %21 {offsets = [8, 0], sizes = [1, 32], strides = [1, 1]} : vector<9x32xf32> to vector<1x32xf32>
    %87 = vector.shape_cast %86 : vector<1x32xf32> to vector<32xf32>
    %88 = vector.shape_cast %87 : vector<32xf32> to vector<1x1x32xf32>
    %89 = vector.broadcast %88 : vector<1x1x32xf32> to vector<16x16x32xf32>
    %90 = arith.mulf %85, %89 : vector<16x16x32xf32>
    %91 = arith.addf %84, %90 : vector<16x16x32xf32>
    %cst_31 = arith.constant 0.000000e+00 : f32
    %cst_32 = arith.constant 6.000000e+00 : f32
    %92 = vector.broadcast %cst_31 : f32 to vector<16x16x32xf32>
    %93 = arith.maximumf %92, %91 : vector<16x16x32xf32>
    %94 = vector.broadcast %cst_32 : f32 to vector<16x16x32xf32>
    %95 = arith.minimumf %94, %93 : vector<16x16x32xf32>
    %96 = vector.shape_cast %95 : vector<16x16x32xf32> to vector<256x32xf32>
    %c0_33 = arith.constant 0 : index
    %c0_34 = arith.constant 0 : index
    %97 = vector.load %arg6[%c0_33, %c0_34] : memref<32x8xf32, #tpu.memory_space<vmem>>, vector<32x8xf32>
    %cst_35 = arith.constant dense<0.000000e+00> : vector<256x8xf32>
    %98 = tpu.matmul %96, %97, %cst_35 {dimension_numbers = #tpu.dot_dimension_numbers<[1], [0], [0], [1], [0, 0, 1, 1], [], []>} : vector<256x32xf32>, vector<32x8xf32>, vector<256x8xf32> -> vector<256x8xf32>
    %c0_36 = arith.constant 0 : index
    %c0_37 = arith.constant 0 : index
    %99 = vector.load %arg7[%c0_36, %c0_37] : memref<1x8xf32, #tpu.memory_space<vmem>>, vector<1x8xf32>
    %100 = vector.broadcast %99 : vector<1x8xf32> to vector<256x8xf32>
    %101 = arith.addf %98, %100 : vector<256x8xf32>
    %cst_38 = arith.constant 0.000000e+00 : f32
    %cst_39 = arith.constant 6.000000e+00 : f32
    %102 = vector.broadcast %cst_38 : f32 to vector<256x8xf32>
    %103 = arith.maximumf %102, %101 : vector<256x8xf32>
    %104 = vector.broadcast %cst_39 : f32 to vector<256x8xf32>
    %105 = arith.minimumf %104, %103 : vector<256x8xf32>
    %106 = vector.shape_cast %105 : vector<256x8xf32> to vector<16x16x8xf32>
    %c0_40 = arith.constant 0 : index
    %c0_41 = arith.constant 0 : index
    %c0_42 = arith.constant 0 : index
    %c0_43 = arith.constant 0 : index
    %107 = vector.load %arg8[%c0_40, %c0_41, %c0_42, %c0_43] : memref<1x16x16x8xf32, #tpu.memory_space<vmem>>, vector<1x16x16x8xf32>
    %108 = vector.shape_cast %107 : vector<1x16x16x8xf32> to vector<16x16x8xf32>
    %109 = vector.shape_cast %106 : vector<16x16x8xf32> to vector<1x16x16x8xf32>
    tpu.vector_store %arg8[%c0_40, %c0_41, %c0_42, %c0_43], %109 {strides = array<i32>} : memref<1x16x16x8xf32, #tpu.memory_space<vmem>>, vector<1x16x16x8xf32>,
    return
  }
  func.func @transform_0(%arg0: i32) -> (i32, i32, i32, i32) {
    %c0_i32 = arith.constant 0 : i32
    %c0_i32_0 = arith.constant 0 : i32
    %c0_i32_1 = arith.constant 0 : i32
    %c0_i32_2 = arith.constant 0 : i32
    return %arg0, %c0_i32, %c0_i32_0, %c0_i32_1 : i32, i32, i32, i32
  }
  func.func @transform_1(%arg0: i32) -> (i32, i32) {
    %c0_i32 = arith.constant 0 : i32
    %c0_i32_0 = arith.constant 0 : i32
    %c0_i32_1 = arith.constant 0 : i32
    return %c0_i32, %c0_i32_0 : i32, i32
  }
  func.func @transform_2(%arg0: i32) -> (i32, i32) {
    %c0_i32 = arith.constant 0 : i32
    %c0_i32_0 = arith.constant 0 : i32
    %c0_i32_1 = arith.constant 0 : i32
    return %c0_i32, %c0_i32_0 : i32, i32
  }
  func.func @transform_3(%arg0: i32) -> (i32, i32) {
    %c0_i32 = arith.constant 0 : i32
    %c0_i32_0 = arith.constant 0 : i32
    %c0_i32_1 = arith.constant 0 : i32
    return %c0_i32, %c0_i32_0 : i32, i32
  }
  func.func @transform_4(%arg0: i32) -> (i32, i32) {
    %c0_i32 = arith.constant 0 : i32
    %c0_i32_0 = arith.constant 0 : i32
    %c0_i32_1 = arith.constant 0 : i32
    return %c0_i32, %c0_i32_0 : i32, i32
  }
  func.func @transform_5(%arg0: i32) -> (i32, i32) {
    %c0_i32 = arith.constant 0 : i32
    %c0_i32_0 = arith.constant 0 : i32
    %c0_i32_1 = arith.constant 0 : i32
    return %c0_i32, %c0_i32_0 : i32, i32
  }
  func.func @transform_6(%arg0: i32) -> (i32, i32) {
    %c0_i32 = arith.constant 0 : i32
    %c0_i32_0 = arith.constant 0 : i32
    %c0_i32_1 = arith.constant 0 : i32
    return %c0_i32, %c0_i32_0 : i32, i32
  }
  func.func @transform_7(%arg0: i32) -> (i32, i32, i32, i32) {
    %c0_i32 = arith.constant 0 : i32
    %c0_i32_0 = arith.constant 0 : i32
    %c0_i32_1 = arith.constant 0 : i32
    %c0_i32_2 = arith.constant 0 : i32
    return %arg0, %c0_i32, %c0_i32_0, %c0_i32_1 : i32, i32, i32, i32
  }
}

</mosaic_0001>

<llo_original>
// kernel: tpu_custom_call.1
$region0: #{tpu_custom_call.1}
  #allocation0 [shape = 'u32[]', space=smem, size = 0x4, offset = 0x4, fixed_abs, tag = 'smem constant byte address 0x4 - core index']
  #allocation1 [shape = 'u32[72,128]{1,0:T(1,128)}', space=vmem, size = 0x9000, scoped, tag = 'internal scratch']
  #allocation2 [shape = 'f32[18,18,32]{2,1,0:T(8,128)}', space=vmem, size = 0x36000, scoped, tag = 'scratch operand']
  %s0 = inlined_call_operand.vmem [shape: f32[2,16,16,8], index: 0, kind: input, shape index: {}]
  %s1 = inlined_call_operand.vmem [shape: f32[8,32], index: 1, kind: input, shape index: {}]
  %s2 = inlined_call_operand.vmem [shape: f32[1,32], index: 2, kind: input, shape index: {}]
  %s3 = inlined_call_operand.vmem [shape: f32[9,32], index: 3, kind: input, shape index: {}]
  %s4 = inlined_call_operand.vmem [shape: f32[1,32], index: 4, kind: input, shape index: {}]
  %s5 = inlined_call_operand.vmem [shape: f32[32,8], index: 5, kind: input, shape index: {}]
  %s6 = inlined_call_operand.vmem [shape: f32[1,8], index: 6, kind: input, shape index: {}]
  %s7 = inlined_call_operand.vmem [shape: f32[2,16,16,8], index: 7, kind: output, shape index: {}]
  %s8 = sld [smem:[#allocation0]]
  $region61: #{tpu_custom_call.1} parent=0
    _
  %s10 = ssub.s32 1, %s8
  %s11 = scalar_select 0, %s10, %s8
  loop: start=0, step=1, limit=4
  $region2: #{tpu_custom_call.1} parent=0 // loop_pre_header
    _
  $region3: #{tpu_custom_call.1} parent=0 // loop_header
    %s13 = sphi 0, %s17
    %p14 = scmp.ge.s32.totalorder %s13, 4
    %s23 = sphi 0, %s25
    %s26 = sphi 0, %s23
    %s27 = sphi 0, %s26
    %s43 = sphi 0, %s27
    %s47 = sphi 0, %s47
    %s49 = sphi 0, %s47
    %s50 = sphi 0, %s49
    %s64 = sphi 0, %s50
    %s68 = sphi 0, %s68
    %s70 = sphi 0, %s68
    %s71 = sphi 0, %s70
    %s85 = sphi 0, %s71
    %s89 = sphi 0, %s89
    %s91 = sphi 0, %s89
    %s92 = sphi 0, %s91
    %s106 = sphi 0, %s92
    %s110 = sphi 0, %s110
    %s112 = sphi 0, %s110
    %s113 = sphi 0, %s112
    %s127 = sphi 0, %s113
    %s131 = sphi 0, %s131
    %s133 = sphi 0, %s131
    %s134 = sphi 0, %s133
    %s148 = sphi 0, %s134
    %s152 = sphi 0, %s152
    %s154 = sphi 0, %s152
    %s155 = sphi 0, %s154
    %s169 = sphi 0, %s155
    %s175 = sphi 0, %s177
    %s178 = sphi 0, %s175
    %s179 = sphi 0, %s178
    %s195 = sphi 0, %s179
  $region4: #{tpu_custom_call.1} parent=0 // loop_header_branch
    %16 = sbr.rel (%p14) target = $region8
  $region5: #{tpu_custom_call.1} parent=0 // loop_body
    %s18 = ssub.s32 %s13, 1
    %s19 = ssub.s32 %s13, 2
    %s20 = sadd.s32 %s13, 1
    %s21 = ssub.s32 %s13, %s20
    %p22 = scmp.eq.s32.totalorder %s21, 0
    %s24 = sadd.s32 %s23, 1
    %s25 = scalar_select %p22, %s23, %s24
    %p28 = pneg %p22
    %p29 = scmp.eq.s32.totalorder %s13, 1
    %p30 = por %p28, %p29
    %p31 = scmp.ne.s32.totalorder %s23, %s26
    %p32 = scmp.eq.s32.totalorder %s13, 0
    %p33 = por %p31, %p32
    %p34 = scmp.ne.s32.totalorder %s23, %s26
    %p35 = scmp.eq.s32.totalorder %s18, 1
    %p36 = por %p34, %p35
    %p37 = scmp.ne.s32.totalorder %s26, %s27
    %p38 = scmp.eq.s32.totalorder %s18, 0
    %p39 = por %p37, %p38
    %p40 = scmp.ne.s32.totalorder %s26, %s27
    %p41 = scmp.eq.s32.totalorder %s19, 1
    %p42 = por %p40, %p41
    %p44 = scmp.ne.s32.totalorder %s27, %s43
    %p45 = scmp.eq.s32.totalorder %s19, 0
    %p46 = por %p44, %p45
    %s48 = sadd.s32 %s47, 1
    %p51 = scmp.eq.s32.totalorder %s13, 1
    %p52 = scmp.ne.s32.totalorder %s47, %s49
    %p53 = scmp.eq.s32.totalorder %s13, 0
    %p54 = por %p52, %p53
    %p55 = scmp.ne.s32.totalorder %s47, %s49
    %p56 = scmp.eq.s32.totalorder %s18, 1
    %p57 = por %p55, %p56
    %p58 = scmp.ne.s32.totalorder %s49, %s50
    %p59 = scmp.eq.s32.totalorder %s18, 0
    %p60 = por %p58, %p59
    %p61 = scmp.ne.s32.totalorder %s49, %s50
    %p62 = scmp.eq.s32.totalorder %s19, 1
    %p63 = por %p61, %p62
    %p65 = scmp.ne.s32.totalorder %s50, %s64
    %p66 = scmp.eq.s32.totalorder %s19, 0
    %p67 = por %p65, %p66
    %s69 = sadd.s32 %s68, 1
    %p72 = scmp.eq.s32.totalorder %s13, 1
    %p73 = scmp.ne.s32.totalorder %s68, %s70
    %p74 = scmp.eq.s32.totalorder %s13, 0
    %p75 = por %p73, %p74
    %p76 = scmp.ne.s32.totalorder %s68, %s70
    %p77 = scmp.eq.s32.totalorder %s18, 1
    %p78 = por %p76, %p77
    %p79 = scmp.ne.s32.totalorder %s70, %s71
    %p80 = scmp.eq.s32.totalorder %s18, 0
    %p81 = por %p79, %p80
    %p82 = scmp.ne.s32.totalorder %s70, %s71
    %p83 = scmp.eq.s32.totalorder %s19, 1
    %p84 = por %p82, %p83
    %p86 = scmp.ne.s32.totalorder %s71, %s85
    %p87 = scmp.eq.s32.totalorder %s19, 0
    %p88 = por %p86, %p87
    %s90 = sadd.s32 %s89, 1
    %p93 = scmp.eq.s32.totalorder %s13, 1
    %p94 = scmp.ne.s32.totalorder %s89, %s91
    %p95 = scmp.eq.s32.totalorder %s13, 0
    %p96 = por %p94, %p95
    %p97 = scmp.ne.s32.totalorder %s89, %s91
    %p98 = scmp.eq.s32.totalorder %s18, 1
    %p99 = por %p97, %p98
    %p100 = scmp.ne.s32.totalorder %s91, %s92
    %p101 = scmp.eq.s32.totalorder %s18, 0
    %p102 = por %p100, %p101
    %p103 = scmp.ne.s32.totalorder %s91, %s92
    %p104 = scmp.eq.s32.totalorder %s19, 1
    %p105 = por %p103, %p104
    %p107 = scmp.ne.s32.totalorder %s92, %s106
    %p108 = scmp.eq.s32.totalorder %s19, 0
    %p109 = por %p107, %p108
    %s111 = sadd.s32 %s110, 1
    %p114 = scmp.eq.s32.totalorder %s13, 1
    %p115 = scmp.ne.s32.totalorder %s110, %s112
    %p116 = scmp.eq.s32.totalorder %s13, 0
    %p117 = por %p115, %p116
    %p118 = scmp.ne.s32.totalorder %s110, %s112
    %p119 = scmp.eq.s32.totalorder %s18, 1
    %p120 = por %p118, %p119
    %p121 = scmp.ne.s32.totalorder %s112, %s113
    %p122 = scmp.eq.s32.totalorder %s18, 0
    %p123 = por %p121, %p122
    %p124 = scmp.ne.s32.totalorder %s112, %s113
    %p125 = scmp.eq.s32.totalorder %s19, 1
    %p126 = por %p124, %p125
    %p128 = scmp.ne.s32.totalorder %s113, %s127
    %p129 = scmp.eq.s32.totalorder %s19, 0
    %p130 = por %p128, %p129
    %s132 = sadd.s32 %s131, 1
    %p135 = scmp.eq.s32.totalorder %s13, 1
    %p136 = scmp.ne.s32.totalorder %s131, %s133
    %p137 = scmp.eq.s32.totalorder %s13, 0
    %p138 = por %p136, %p137
    %p139 = scmp.ne.s32.totalorder %s131, %s133
    %p140 = scmp.eq.s32.totalorder %s18, 1
    %p141 = por %p139, %p140
    %p142 = scmp.ne.s32.totalorder %s133, %s134
    %p143 = scmp.eq.s32.totalorder %s18, 0
    %p144 = por %p142, %p143
    %p145 = scmp.ne.s32.totalorder %s133, %s134
    %p146 = scmp.eq.s32.totalorder %s19, 1
    %p147 = por %p145, %p146
    %p149 = scmp.ne.s32.totalorder %s134, %s148
    %p150 = scmp.eq.s32.totalorder %s19, 0
    %p151 = por %p149, %p150
    %s153 = sadd.s32 %s152, 1
    %p156 = scmp.eq.s32.totalorder %s13, 1
    %p157 = scmp.ne.s32.totalorder %s152, %s154
    %p158 = scmp.eq.s32.totalorder %s13, 0
    %p159 = por %p157, %p158
    %p160 = scmp.ne.s32.totalorder %s152, %s154
    %p161 = scmp.eq.s32.totalorder %s18, 1
    %p162 = por %p160, %p161
    %p163 = scmp.ne.s32.totalorder %s154, %s155
    %p164 = scmp.eq.s32.totalorder %s18, 0
    %p165 = por %p163, %p164
    %p166 = scmp.ne.s32.totalorder %s154, %s155
    %p167 = scmp.eq.s32.totalorder %s19, 1
    %p168 = por %p166, %p167
    %p170 = scmp.ne.s32.totalorder %s155, %s169
    %p171 = scmp.eq.s32.totalorder %s19, 0
    %p172 = por %p170, %p171
    %s173 = ssub.s32 %s13, %s20
    %p174 = scmp.eq.s32.totalorder %s173, 0
    %s176 = sadd.s32 %s175, 1
    %s177 = scalar_select %p174, %s175, %s176
    %p180 = pneg %p174
    %p181 = scmp.eq.s32.totalorder %s13, 1
    %p182 = por %p180, %p181
    %p183 = scmp.ne.s32.totalorder %s175, %s178
    %p184 = scmp.eq.s32.totalorder %s13, 0
    %p185 = por %p183, %p184
    %p186 = scmp.ne.s32.totalorder %s175, %s178
    %p187 = scmp.eq.s32.totalorder %s18, 1
    %p188 = por %p186, %p187
    %p189 = scmp.ne.s32.totalorder %s178, %s179
    %p190 = scmp.eq.s32.totalorder %s18, 0
    %p191 = por %p189, %p190
    %p192 = scmp.ne.s32.totalorder %s178, %s179
    %p193 = scmp.eq.s32.totalorder %s19, 1
    %p194 = por %p192, %p193
    %p196 = scmp.ne.s32.totalorder %s179, %s195
    %p197 = scmp.eq.s32.totalorder %s19, 0
    %p198 = por %p196, %p197
    %p199 = scmp.le.s32.totalorder 1, %s13
    %p200 = scmp.lt.s32.totalorder %s13, 3
    %p201 = pnand %p199, %p200
    %p202 = pneg %p201
    // Predicated region
    $region9: #{tpu_custom_call.1} parent=5 // pred_check
      _
    $region10: #{tpu_custom_call.1} parent=5 // pred_check_branch
      %204 = sbr.rel (%p201) target = $region12
    $region11: #{tpu_custom_call.1} parent=5 // pred_region
      %s205 = ssub.s32 %s13, 1
      // Predicated region
      $region13: #{tpu_custom_call.1} parent=11 // pred_check
        %p206 = pneg %p60
      $region14: #{tpu_custom_call.1} parent=11 // pred_check_branch
        %208 = sbr.rel (%p206) target = $region16
      $region15: #{tpu_custom_call.1} parent=11 // pred_region
        _
      $region16: #{tpu_custom_call.1} parent=11 // pred_fallthru
        _
      // Predicated region
      $region17: #{tpu_custom_call.1} parent=11 // pred_check
        %p209 = pneg %p81
      $region18: #{tpu_custom_call.1} parent=11 // pred_check_branch
        %211 = sbr.rel (%p209) target = $region20
      $region19: #{tpu_custom_call.1} parent=11 // pred_region
        _
      $region20: #{tpu_custom_call.1} parent=11 // pred_fallthru
        _
      // Predicated region
      $region21: #{tpu_custom_call.1} parent=11 // pred_check
        %p212 = pneg %p102
      $region22: #{tpu_custom_call.1} parent=11 // pred_check_branch
        %214 = sbr.rel (%p212) target = $region24
      $region23: #{tpu_custom_call.1} parent=11 // pred_region
        _
      $region24: #{tpu_custom_call.1} parent=11 // pred_fallthru
        _
      // Predicated region
      $region25: #{tpu_custom_call.1} parent=11 // pred_check
        %p215 = pneg %p123
      $region26: #{tpu_custom_call.1} parent=11 // pred_check_branch
        %217 = sbr.rel (%p215) target = $region28
      $region27: #{tpu_custom_call.1} parent=11 // pred_region
        _
      $region28: #{tpu_custom_call.1} parent=11 // pred_fallthru
        _
      // Predicated region
      $region29: #{tpu_custom_call.1} parent=11 // pred_check
        %p218 = pneg %p144
      $region30: #{tpu_custom_call.1} parent=11 // pred_check_branch
        %220 = sbr.rel (%p218) target = $region32
      $region31: #{tpu_custom_call.1} parent=11 // pred_region
        _
      $region32: #{tpu_custom_call.1} parent=11 // pred_fallthru
        _
      // Predicated region
      $region33: #{tpu_custom_call.1} parent=11 // pred_check
        %p221 = pneg %p165
      $region34: #{tpu_custom_call.1} parent=11 // pred_check_branch
        %223 = sbr.rel (%p221) target = $region36
      $region35: #{tpu_custom_call.1} parent=11 // pred_region
        _
      $region36: #{tpu_custom_call.1} parent=11 // pred_fallthru
        _
    $region12: #{tpu_custom_call.1} parent=5 // pred_fallthru
      _
    %p224 = scmp.lt.s32.totalorder %s13, 2
    // Predicated region
    $region37: #{tpu_custom_call.1} parent=5 // pred_check
      %p225 = pneg %p224
    $region38: #{tpu_custom_call.1} parent=5 // pred_check_branch
      %227 = sbr.rel (%p225) target = $region40
    $region39: #{tpu_custom_call.1} parent=5 // pred_region
      // Predicated region
      $region41: #{tpu_custom_call.1} parent=39 // pred_check
        %p228 = pneg %p33
      $region42: #{tpu_custom_call.1} parent=39 // pred_check_branch
        %230 = sbr.rel (%p228) target = $region44
      $region43: #{tpu_custom_call.1} parent=39 // pred_region
        %p231 = scmp.lt.s32.totalorder %s13, 1
        %s232 = scalar_select %p231, %s13, 1
        %s233 = smul.addr %s232, 32
        %s234 = smul.addr %s233, 8
        %s235 = scalar_lea.vmem %s0, %s234
      $region44: #{tpu_custom_call.1} parent=39 // pred_fallthru
        _
    $region40: #{tpu_custom_call.1} parent=5 // pred_fallthru
      _
    %p236 = scmp.le.s32.totalorder 1, %s13
    %p237 = scmp.lt.s32.totalorder %s13, 3
    %p238 = pnand %p236, %p237
    %p239 = pneg %p238
    // Predicated region
    $region45: #{tpu_custom_call.1} parent=5 // pred_check
      _
    $region46: #{tpu_custom_call.1} parent=5 // pred_check_branch
      %241 = sbr.rel (%p238) target = $region48
    $region47: #{tpu_custom_call.1} parent=5 // pred_region
      %s242 = ssub.s32 %s13, 1
      %p243 = scmp.lt.s32.totalorder %s18, 1
      %s244 = scalar_select %p243, %s18, 1
      %s245 = smul.addr %s244, 32
      %s246 = smul.addr %s245, 8
      %s247 = scalar_lea.vmem %s0, %s246
      %p248 = pneg %p39
      %p249 = pneg %p36
      %p250 = pneg %p60
      %p251 = pneg %p57
      %p252 = pneg %p81
      %p253 = pneg %p78
      %p254 = pneg %p102
      %p255 = pneg %p99
      %p256 = pneg %p123
      %p257 = pneg %p120
      %p258 = pneg %p144
      %p259 = pneg %p141
      %p260 = pneg %p165
      %p261 = pneg %p162
      %p262 = pneg %p191
      %p263 = pneg %p188
      %p264 = scmp.lt.s32.totalorder %s18, 1
      %s265 = scalar_select %p264, %s18, 1
      %s266 = smul.addr %s265, 32
      %s267 = smul.addr %s266, 8
      %s268 = scalar_lea.vmem %s7, %s267
      %p269 = scmp.lt.s32.totalorder %s18, 1
      %s270 = scalar_select %p269, %s18, 1
      %s271 = smul.addr %s270, 32
      %s272 = smul.addr %s271, 8
      %s273 = scalar_lea.vmem %s0, %s272
      %p274 = scmp.lt.s32.totalorder %s18, 1
      %s275 = scalar_select %p274, %s18, 1
      %s276 = smul.addr %s275, 32
      %s277 = smul.addr %s276, 8
      %s278 = scalar_lea.vmem %s7, %s277
      %v279 = vld [vmem:[%s273] sm:$0xff]
      %v280 = vld [vmem:[%s273 + $0x8] sm:$0xff]
      %v281 = vld [vmem:[%s273 + $0x10] sm:$0xff]
      %v282 = vld [vmem:[%s273 + $0x18] sm:$0xff]
      %v283 = vld [vmem:[%s273 + $0x20] sm:$0xff]
      %v284 = vld [vmem:[%s273 + $0x28] sm:$0xff]
      %v285 = vld [vmem:[%s273 + $0x30] sm:$0xff]
      %v286 = vld [vmem:[%s273 + $0x38] sm:$0xff]
      %v287 = vld [vmem:[%s273 + $0x40] sm:$0xff]
      %v288 = vld [vmem:[%s273 + $0x48] sm:$0xff]
      %v289 = vld [vmem:[%s273 + $0x50] sm:$0xff]
      %v290 = vld [vmem:[%s273 + $0x58] sm:$0xff]
      %v291 = vld [vmem:[%s273 + $0x60] sm:$0xff]
      %v292 = vld [vmem:[%s273 + $0x68] sm:$0xff]
      %v293 = vld [vmem:[%s273 + $0x70] sm:$0xff]
      %v294 = vld [vmem:[%s273 + $0x78] sm:$0xff]
      %v295 = vld [vmem:[%s273 + $0x80] sm:$0xff]
      %v296 = vld [vmem:[%s273 + $0x88] sm:$0xff]
      %v297 = vld [vmem:[%s273 + $0x90] sm:$0xff]
      %v298 = vld [vmem:[%s273 + $0x98] sm:$0xff]
      %v299 = vld [vmem:[%s273 + $0xa0] sm:$0xff]
      %v300 = vld [vmem:[%s273 + $0xa8] sm:$0xff]
      %v301 = vld [vmem:[%s273 + $0xb0] sm:$0xff]
      %v302 = vld [vmem:[%s273 + $0xb8] sm:$0xff]
      %v303 = vld [vmem:[%s273 + $0xc0] sm:$0xff]
      %v304 = vld [vmem:[%s273 + $0xc8] sm:$0xff]
      %v305 = vld [vmem:[%s273 + $0xd0] sm:$0xff]
      %v306 = vld [vmem:[%s273 + $0xd8] sm:$0xff]
      %v307 = vld [vmem:[%s273 + $0xe0] sm:$0xff]
      %v308 = vld [vmem:[%s273 + $0xe8] sm:$0xff]
      %v309 = vld [vmem:[%s273 + $0xf0] sm:$0xff]
      %v310 = vld [vmem:[%s273 + $0xf8] sm:$0xff]
      %v311 = vld [vmem:[%s1] sm:$0xff]
      %v312 = vld [vmem:[%s2] sm:$0x1]
      %v314 = vperm.slane %v312, 0
      %vm316 = vcmask 64512
      %v318 = vsel %vm316, %v279, 0
      %v321 = vsel %vm316, %v280, 0
      %v324 = vsel %vm316, %v281, 0
      %v327 = vsel %vm316, %v282, 0
      %v330 = vsel %vm316, %v283, 0
      %v333 = vsel %vm316, %v284, 0
      %v336 = vsel %vm316, %v285, 0
      %v339 = vsel %vm316, %v286, 0
      %v342 = vsel %vm316, %v287, 0
      %v345 = vsel %vm316, %v288, 0
      %v348 = vsel %vm316, %v289, 0
      %v351 = vsel %vm316, %v290, 0
      %v354 = vsel %vm316, %v291, 0
      %v357 = vsel %vm316, %v292, 0
      %v360 = vsel %vm316, %v293, 0
      %v363 = vsel %vm316, %v294, 0
      %v366 = vsel %vm316, %v295, 0
      %v369 = vsel %vm316, %v296, 0
      %v372 = vsel %vm316, %v297, 0
      %v375 = vsel %vm316, %v298, 0
      %v378 = vsel %vm316, %v299, 0
      %v381 = vsel %vm316, %v300, 0
      %v384 = vsel %vm316, %v301, 0
      %v387 = vsel %vm316, %v302, 0
      %v390 = vsel %vm316, %v303, 0
      %v393 = vsel %vm316, %v304, 0
      %v396 = vsel %vm316, %v305, 0
      %v399 = vsel %vm316, %v306, 0
      %v402 = vsel %vm316, %v307, 0
      %v405 = vsel %vm316, %v308, 0
      %v408 = vsel %vm316, %v309, 0
      %v411 = vsel %vm316, %v310, 0
      %413 = vmatpush.msra.mxu0 0.0
      %414 = vmatpush.msra.mxu0 0.0
      %415 = vmatpush.msra.mxu0 0.0
      %416 = vmatpush.msra.mxu0 0.0
      %417 = vmatpush.msra.mxu0 0.0
      %418 = vmatpush.msra.mxu0 0.0
      %419 = vmatpush.msra.mxu0 0.0
      %420 = vmatpush.msra.mxu0 0.0
      %421 = vmatpush.msra.mxu0 0.0
      %422 = vmatpush.msra.mxu0 0.0
      %423 = vmatpush.msra.mxu0 0.0
      %424 = vmatpush.msra.mxu0 0.0
      %425 = vmatpush.msra.mxu0 0.0
      %426 = vmatpush.msra.mxu0 0.0
      %427 = vmatpush.msra.mxu0 0.0
      %428 = vmatpush.msra.mxu0 %v311
      %429 = vmatmul.f32.gmra.mxu0 %v318
      %v430 = vpop.f32.mrf.mxu0
      %v431 = vadd.f32 %v314, %v430
      %432 = vmatmul.f32.gmra.mxu0 %v321
      %v433 = vpop.f32.mrf.mxu0
      %v434 = vadd.f32 %v314, %v433
      %435 = vmatmul.f32.gmra.mxu0 %v324
      %v436 = vpop.f32.mrf.mxu0
      %v437 = vadd.f32 %v314, %v436
      %438 = vmatmul.f32.gmra.mxu0 %v327
      %v439 = vpop.f32.mrf.mxu0
      %v440 = vadd.f32 %v314, %v439
      %441 = vmatmul.f32.gmra.mxu0 %v330
      %v442 = vpop.f32.mrf.mxu0
      %v443 = vadd.f32 %v314, %v442
      %444 = vmatmul.f32.gmra.mxu0 %v333
      %v445 = vpop.f32.mrf.mxu0
      %v446 = vadd.f32 %v314, %v445
      %447 = vmatmul.f32.gmra.mxu0 %v336
      %v448 = vpop.f32.mrf.mxu0
      %v449 = vadd.f32 %v314, %v448
      %450 = vmatmul.f32.gmra.mxu0 %v339
      %v451 = vpop.f32.mrf.mxu0
      %v452 = vadd.f32 %v314, %v451
      %453 = vmatmul.f32.gmra.mxu0 %v342
      %v454 = vpop.f32.mrf.mxu0
      %v455 = vadd.f32 %v314, %v454
      %456 = vmatmul.f32.gmra.mxu0 %v345
      %v457 = vpop.f32.mrf.mxu0
      %v458 = vadd.f32 %v314, %v457
      %459 = vmatmul.f32.gmra.mxu0 %v348
      %v460 = vpop.f32.mrf.mxu0
      %v461 = vadd.f32 %v314, %v460
      %462 = vmatmul.f32.gmra.mxu0 %v351
      %v463 = vpop.f32.mrf.mxu0
      %v464 = vadd.f32 %v314, %v463
      %465 = vmatmul.f32.gmra.mxu0 %v354
      %v466 = vpop.f32.mrf.mxu0
      %v467 = vadd.f32 %v314, %v466
      %468 = vmatmul.f32.gmra.mxu0 %v357
      %v469 = vpop.f32.mrf.mxu0
      %v470 = vadd.f32 %v314, %v469
      %471 = vmatmul.f32.gmra.mxu0 %v360
      %v472 = vpop.f32.mrf.mxu0
      %v473 = vadd.f32 %v314, %v472
      %474 = vmatmul.f32.gmra.mxu0 %v363
      %v475 = vpop.f32.mrf.mxu0
      %v476 = vadd.f32 %v314, %v475
      %477 = vmatmul.f32.gmra.mxu0 %v366
      %v478 = vpop.f32.mrf.mxu0
      %v479 = vadd.f32 %v314, %v478
      %480 = vmatmul.f32.gmra.mxu0 %v369
      %v481 = vpop.f32.mrf.mxu0
      %v482 = vadd.f32 %v314, %v481
      %483 = vmatmul.f32.gmra.mxu0 %v372
      %v484 = vpop.f32.mrf.mxu0
      %v485 = vadd.f32 %v314, %v484
      %486 = vmatmul.f32.gmra.mxu0 %v375
      %v487 = vpop.f32.mrf.mxu0
      %v488 = vadd.f32 %v314, %v487
      %489 = vmatmul.f32.gmra.mxu0 %v378
      %v490 = vpop.f32.mrf.mxu0
      %v491 = vadd.f32 %v314, %v490
      %492 = vmatmul.f32.gmra.mxu0 %v381
      %v493 = vpop.f32.mrf.mxu0
      %v494 = vadd.f32 %v314, %v493
      %495 = vmatmul.f32.gmra.mxu0 %v384
      %v496 = vpop.f32.mrf.mxu0
      %v497 = vadd.f32 %v314, %v496
      %498 = vmatmul.f32.gmra.mxu0 %v387
      %v499 = vpop.f32.mrf.mxu0
      %v500 = vadd.f32 %v314, %v499
      %501 = vmatmul.f32.gmra.mxu0 %v390
      %v502 = vpop.f32.mrf.mxu0
      %v503 = vadd.f32 %v314, %v502
      %504 = vmatmul.f32.gmra.mxu0 %v393
      %v505 = vpop.f32.mrf.mxu0
      %v506 = vadd.f32 %v314, %v505
      %507 = vmatmul.f32.gmra.mxu0 %v396
      %v508 = vpop.f32.mrf.mxu0
      %v509 = vadd.f32 %v314, %v508
      %510 = vmatmul.f32.gmra.mxu0 %v399
      %v511 = vpop.f32.mrf.mxu0
      %v512 = vadd.f32 %v314, %v511
      %513 = vmatmul.f32.gmra.mxu0 %v402
      %v514 = vpop.f32.mrf.mxu0
      %v515 = vadd.f32 %v314, %v514
      %516 = vmatmul.f32.gmra.mxu0 %v405
      %v517 = vpop.f32.mrf.mxu0
      %v518 = vadd.f32 %v314, %v517
      %519 = vmatmul.f32.gmra.mxu0 %v408
      %v520 = vpop.f32.mrf.mxu0
      %v521 = vadd.f32 %v314, %v520
      %522 = vmatmul.f32.gmra.mxu0 %v411
      %v523 = vpop.f32.mrf.mxu0
      %v524 = vadd.f32 %v314, %v523
      %525 = vdwg.mxu0
      %v526 = vmax.f32 %v431, 0.0
      %v527 = vmax.f32 %v434, 0.0
      %v528 = vmax.f32 %v437, 0.0
      %v529 = vmax.f32 %v440, 0.0
      %v530 = vmax.f32 %v443, 0.0
      %v531 = vmax.f32 %v446, 0.0
      %v532 = vmax.f32 %v449, 0.0
      %v533 = vmax.f32 %v452, 0.0
      %v534 = vmax.f32 %v455, 0.0
      %v535 = vmax.f32 %v458, 0.0
      %v536 = vmax.f32 %v461, 0.0
      %v537 = vmax.f32 %v464, 0.0
      %v538 = vmax.f32 %v467, 0.0
      %v539 = vmax.f32 %v470, 0.0
      %v540 = vmax.f32 %v473, 0.0
      %v541 = vmax.f32 %v476, 0.0
      %v542 = vmax.f32 %v479, 0.0
      %v543 = vmax.f32 %v482, 0.0
      %v544 = vmax.f32 %v485, 0.0
      %v545 = vmax.f32 %v488, 0.0
      %v546 = vmax.f32 %v491, 0.0
      %v547 = vmax.f32 %v494, 0.0
      %v548 = vmax.f32 %v497, 0.0
      %v549 = vmax.f32 %v500, 0.0
      %v550 = vmax.f32 %v503, 0.0
      %v551 = vmax.f32 %v506, 0.0
      %v552 = vmax.f32 %v509, 0.0
      %v553 = vmax.f32 %v512, 0.0
      %v554 = vmax.f32 %v515, 0.0
      %v555 = vmax.f32 %v518, 0.0
      %v556 = vmax.f32 %v521, 0.0
      %v557 = vmax.f32 %v524, 0.0
      %v558 = vmin.f32 %v526, 6.0
      %v559 = vmin.f32 %v527, 6.0
      %v560 = vmin.f32 %v528, 6.0
      %v561 = vmin.f32 %v529, 6.0
      %v562 = vmin.f32 %v530, 6.0
      %v563 = vmin.f32 %v531, 6.0
      %v564 = vmin.f32 %v532, 6.0
      %v565 = vmin.f32 %v533, 6.0
      %v566 = vmin.f32 %v534, 6.0
      %v567 = vmin.f32 %v535, 6.0
      %v568 = vmin.f32 %v536, 6.0
      %v569 = vmin.f32 %v537, 6.0
      %v570 = vmin.f32 %v538, 6.0
      %v571 = vmin.f32 %v539, 6.0
      %v572 = vmin.f32 %v540, 6.0
      %v573 = vmin.f32 %v541, 6.0
      %v574 = vmin.f32 %v542, 6.0
      %v575 = vmin.f32 %v543, 6.0
      %v576 = vmin.f32 %v544, 6.0
      %v577 = vmin.f32 %v545, 6.0
      %v578 = vmin.f32 %v546, 6.0
      %v579 = vmin.f32 %v547, 6.0
      %v580 = vmin.f32 %v548, 6.0
      %v581 = vmin.f32 %v549, 6.0
      %v582 = vmin.f32 %v550, 6.0
      %v583 = vmin.f32 %v551, 6.0
      %v584 = vmin.f32 %v552, 6.0
      %v585 = vmin.f32 %v553, 6.0
      %v586 = vmin.f32 %v554, 6.0
      %v587 = vmin.f32 %v555, 6.0
      %v588 = vmin.f32 %v556, 6.0
      %v589 = vmin.f32 %v557, 6.0
      %vm590 = vcmask 261120
      %591 = vst.msk [vmem:[#allocation2] sm:$0xff] %vm590, 0.0
      %592 = vst.msk [vmem:[#allocation2 + $0x8] sm:$0xff] %vm590, 0.0
      %vm593 = vcmask 254976
      %594 = vst.msk [vmem:[#allocation2 + $0x10] sm:$0x3] %vm593, 0.0
      %s595 = scalar_lea.vmem [#allocation2], 408
      %596 = vst.msk [vmem:[%s595] sm:$0xff] %vm590, 0.0
      %597 = vst.msk [vmem:[%s595 + $0x8] sm:$0xff] %vm590, 0.0
      %598 = vst.msk [vmem:[%s595 + $0x10] sm:$0x3] %vm593, 0.0
      %vm599 = vcmask 253952
      %600 = vst.msk [vmem:[#allocation2] sm:$0x1] %vm599, 0.0
      %601 = vst.msk [vmem:[#allocation2 + $0x18] sm:$0x1] %vm599, 0.0
      %602 = vst.msk [vmem:[#allocation2 + $0x30] sm:$0x1] %vm599, 0.0
      %603 = vst.msk [vmem:[#allocation2 + $0x48] sm:$0x1] %vm599, 0.0
      %604 = vst.msk [vmem:[#allocation2 + $0x60] sm:$0x1] %vm599, 0.0
      %605 = vst.msk [vmem:[#allocation2 + $0x78] sm:$0x1] %vm599, 0.0
      %606 = vst.msk [vmem:[#allocation2 + $0x90] sm:$0x1] %vm599, 0.0
      %607 = vst.msk [vmem:[#allocation2 + $0xa8] sm:$0x1] %vm599, 0.0
      %608 = vst.msk [vmem:[#allocation2 + $0xc0] sm:$0x1] %vm599, 0.0
      %609 = vst.msk [vmem:[#allocation2 + $0xd8] sm:$0x1] %vm599, 0.0
      %610 = vst.msk [vmem:[#allocation2 + $0xf0] sm:$0x1] %vm599, 0.0
      %611 = vst.msk [vmem:[#allocation2 + $0x108] sm:$0x1] %vm599, 0.0
      %612 = vst.msk [vmem:[#allocation2 + $0x120] sm:$0x1] %vm599, 0.0
      %613 = vst.msk [vmem:[#allocation2 + $0x138] sm:$0x1] %vm599, 0.0
      %614 = vst.msk [vmem:[#allocation2 + $0x150] sm:$0x1] %vm599, 0.0
      %615 = vst.msk [vmem:[#allocation2 + $0x168] sm:$0x1] %vm599, 0.0
      %616 = vst.msk [vmem:[#allocation2 + $0x180] sm:$0x1] %vm599, 0.0
      %617 = vst.msk [vmem:[#allocation2 + $0x198] sm:$0x1] %vm599, 0.0
      %618 = vst.msk [vmem:[#allocation2 + $0x11] sm:$0x1] %vm599, 0.0
      %619 = vst.msk [vmem:[#allocation2 + $0x29] sm:$0x1] %vm599, 0.0
      %620 = vst.msk [vmem:[#allocation2 + $0x41] sm:$0x1] %vm599, 0.0
      %621 = vst.msk [vmem:[#allocation2 + $0x59] sm:$0x1] %vm599, 0.0
      %622 = vst.msk [vmem:[#allocation2 + $0x71] sm:$0x1] %vm599, 0.0
      %623 = vst.msk [vmem:[#allocation2 + $0x89] sm:$0x1] %vm599, 0.0
      %624 = vst.msk [vmem:[#allocation2 + $0xa1] sm:$0x1] %vm599, 0.0
      %625 = vst.msk [vmem:[#allocation2 + $0xb9] sm:$0x1] %vm599, 0.0
      %626 = vst.msk [vmem:[#allocation2 + $0xd1] sm:$0x1] %vm599, 0.0
      %627 = vst.msk [vmem:[#allocation2 + $0xe9] sm:$0x1] %vm599, 0.0
      %628 = vst.msk [vmem:[#allocation2 + $0x101] sm:$0x1] %vm599, 0.0
      %629 = vst.msk [vmem:[#allocation2 + $0x119] sm:$0x1] %vm599, 0.0
      %630 = vst.msk [vmem:[#allocation2 + $0x131] sm:$0x1] %vm599, 0.0
      %631 = vst.msk [vmem:[#allocation2 + $0x149] sm:$0x1] %vm599, 0.0
      %632 = vst.msk [vmem:[#allocation2 + $0x161] sm:$0x1] %vm599, 0.0
      %633 = vst.msk [vmem:[#allocation2 + $0x179] sm:$0x1] %vm599, 0.0
      %634 = vst.msk [vmem:[#allocation2 + $0x191] sm:$0x1] %vm599, 0.0
      %635 = vst.msk [vmem:[#allocation2 + $0x1a9] sm:$0x1] %vm599, 0.0
      %s636 = scalar_lea.vmem [#allocation2], 24
      %637 = vst.msk [vmem:[%s636 + $0x1] sm:$0xff] %vm590, %v558
      %638 = vst.msk [vmem:[%s636 + $0x9] sm:$0xff] %vm590, %v559
      %639 = vst.msk [vmem:[%s636 + $0x19] sm:$0xff] %vm590, %v560
      %640 = vst.msk [vmem:[%s636 + $0x21] sm:$0xff] %vm590, %v561
      %641 = vst.msk [vmem:[%s636 + $0x31] sm:$0xff] %vm590, %v562
      %642 = vst.msk [vmem:[%s636 + $0x39] sm:$0xff] %vm590, %v563
      %643 = vst.msk [vmem:[%s636 + $0x49] sm:$0xff] %vm590, %v564
      %644 = vst.msk [vmem:[%s636 + $0x51] sm:$0xff] %vm590, %v565
      %645 = vst.msk [vmem:[%s636 + $0x61] sm:$0xff] %vm590, %v566
      %646 = vst.msk [vmem:[%s636 + $0x69] sm:$0xff] %vm590, %v567
      %647 = vst.msk [vmem:[%s636 + $0x79] sm:$0xff] %vm590, %v568
      %648 = vst.msk [vmem:[%s636 + $0x81] sm:$0xff] %vm590, %v569
      %649 = vst.msk [vmem:[%s636 + $0x91] sm:$0xff] %vm590, %v570
      %650 = vst.msk [vmem:[%s636 + $0x99] sm:$0xff] %vm590, %v571
      %651 = vst.msk [vmem:[%s636 + $0xa9] sm:$0xff] %vm590, %v572
      %652 = vst.msk [vmem:[%s636 + $0xb1] sm:$0xff] %vm590, %v573
      %653 = vst.msk [vmem:[%s636 + $0xc1] sm:$0xff] %vm590, %v574
      %654 = vst.msk [vmem:[%s636 + $0xc9] sm:$0xff] %vm590, %v575
      %655 = vst.msk [vmem:[%s636 + $0xd9] sm:$0xff] %vm590, %v576
      %656 = vst.msk [vmem:[%s636 + $0xe1] sm:$0xff] %vm590, %v577
      %657 = vst.msk [vmem:[%s636 + $0xf1] sm:$0xff] %vm590, %v578
      %658 = vst.msk [vmem:[%s636 + $0xf9] sm:$0xff] %vm590, %v579
      %659 = vst.msk [vmem:[%s636 + $0x109] sm:$0xff] %vm590, %v580
      %660 = vst.msk [vmem:[%s636 + $0x111] sm:$0xff] %vm590, %v581
      %661 = vst.msk [vmem:[%s636 + $0x121] sm:$0xff] %vm590, %v582
      %662 = vst.msk [vmem:[%s636 + $0x129] sm:$0xff] %vm590, %v583
      %663 = vst.msk [vmem:[%s636 + $0x139] sm:$0xff] %vm590, %v584
      %664 = vst.msk [vmem:[%s636 + $0x141] sm:$0xff] %vm590, %v585
      %665 = vst.msk [vmem:[%s636 + $0x151] sm:$0xff] %vm590, %v586
      %666 = vst.msk [vmem:[%s636 + $0x159] sm:$0xff] %vm590, %v587
      %667 = vst.msk [vmem:[%s636 + $0x169] sm:$0xff] %vm590, %v588
      %668 = vst.msk [vmem:[%s636 + $0x171] sm:$0xff] %vm590, %v589
      %v669 = vld [vmem:[#allocation2] sm:$0xff]
      %v670 = vld [vmem:[#allocation2 + $0x8] sm:$0xff]
      %v671 = vld [vmem:[#allocation2 + $0x10] sm:$0x3]
      %v672 = vld [vmem:[#allocation2 + $0x18] sm:$0xff]
      %v673 = vld [vmem:[#allocation2 + $0x20] sm:$0xff]
      %v674 = vld [vmem:[#allocation2 + $0x28] sm:$0x3]
      %v675 = vld [vmem:[#allocation2 + $0x30] sm:$0xff]
      %v676 = vld [vmem:[#allocation2 + $0x38] sm:$0xff]
      %v677 = vld [vmem:[#allocation2 + $0x40] sm:$0x3]
      %v678 = vld [vmem:[#allocation2 + $0x48] sm:$0xff]
      %v679 = vld [vmem:[#allocation2 + $0x50] sm:$0xff]
      %v680 = vld [vmem:[#allocation2 + $0x58] sm:$0x3]
      %v681 = vld [vmem:[#allocation2 + $0x60] sm:$0xff]
      %v682 = vld [vmem:[#allocation2 + $0x68] sm:$0xff]
      %v683 = vld [vmem:[#allocation2 + $0x70] sm:$0x3]
      %v684 = vld [vmem:[#allocation2 + $0x78] sm:$0xff]
      %v685 = vld [vmem:[#allocation2 + $0x80] sm:$0xff]
      %v686 = vld [vmem:[#allocation2 + $0x88] sm:$0x3]
      %v687 = vld [vmem:[#allocation2 + $0x90] sm:$0xff]
      %v688 = vld [vmem:[#allocation2 + $0x98] sm:$0xff]
      %v689 = vld [vmem:[#allocation2 + $0xa0] sm:$0x3]
      %v690 = vld [vmem:[#allocation2 + $0xa8] sm:$0xff]
      %v691 = vld [vmem:[#allocation2 + $0xb0] sm:$0xff]
      %v692 = vld [vmem:[#allocation2 + $0xb8] sm:$0x3]
      %v693 = vld [vmem:[#allocation2 + $0xc0] sm:$0xff]
      %v694 = vld [vmem:[#allocation2 + $0xc8] sm:$0xff]
      %v695 = vld [vmem:[#allocation2 + $0xd0] sm:$0x3]
      %v696 = vld [vmem:[#allocation2 + $0xd8] sm:$0xff]
      %v697 = vld [vmem:[#allocation2 + $0xe0] sm:$0xff]
      %v698 = vld [vmem:[#allocation2 + $0xe8] sm:$0x3]
      %v699 = vld [vmem:[#allocation2 + $0xf0] sm:$0xff]
      %v700 = vld [vmem:[#allocation2 + $0xf8] sm:$0xff]
      %v701 = vld [vmem:[#allocation2 + $0x100] sm:$0x3]
      %v702 = vld [vmem:[#allocation2 + $0x108] sm:$0xff]
      %v703 = vld [vmem:[#allocation2 + $0x110] sm:$0xff]
      %v704 = vld [vmem:[#allocation2 + $0x118] sm:$0x3]
      %v705 = vld [vmem:[#allocation2 + $0x120] sm:$0xff]
      %v706 = vld [vmem:[#allocation2 + $0x128] sm:$0xff]
      %v707 = vld [vmem:[#allocation2 + $0x130] sm:$0x3]
      %v708 = vld [vmem:[#allocation2 + $0x138] sm:$0xff]
      %v709 = vld [vmem:[#allocation2 + $0x140] sm:$0xff]
      %v710 = vld [vmem:[#allocation2 + $0x148] sm:$0x3]
      %v711 = vld [vmem:[#allocation2 + $0x150] sm:$0xff]
      %v712 = vld [vmem:[#allocation2 + $0x158] sm:$0xff]
      %v713 = vld [vmem:[#allocation2 + $0x160] sm:$0x3]
      %v714 = vld [vmem:[#allocation2 + $0x168] sm:$0xff]
      %v715 = vld [vmem:[#allocation2 + $0x170] sm:$0xff]
      %v716 = vld [vmem:[#allocation2 + $0x178] sm:$0x3]
      %v717 = vld [vmem:[#allocation2 + $0x180] sm:$0xff]
      %v718 = vld [vmem:[#allocation2 + $0x188] sm:$0xff]
      %v719 = vld [vmem:[#allocation2 + $0x190] sm:$0x3]
      %v720 = vld [vmem:[#allocation2 + $0x198] sm:$0xff]
      %v721 = vld [vmem:[#allocation2 + $0x1a0] sm:$0xff]
      %v722 = vld [vmem:[#allocation2 + $0x1a8] sm:$0x3]
      %v723 = vld [vmem:[%s3] sm:$0xff]
      %v724 = vld [vmem:[%s3 + $0x8] sm:$0x1]
      %v725 = vld [vmem:[%s4] sm:$0x1]
      %v727 = vperm.slane %v725, 0
      %v729 = vperm.slane %v723, 0
      %v730 = vmul.f32 %v669, %v729
      %v731 = vmul.f32 %v670, %v729
      %v732 = vmul.f32 %v672, %v729
      %v733 = vmul.f32 %v673, %v729
      %v734 = vmul.f32 %v675, %v729
      %v735 = vmul.f32 %v676, %v729
      %v736 = vmul.f32 %v678, %v729
      %v737 = vmul.f32 %v679, %v729
      %v738 = vmul.f32 %v681, %v729
      %v739 = vmul.f32 %v682, %v729
      %v740 = vmul.f32 %v684, %v729
      %v741 = vmul.f32 %v685, %v729
      %v742 = vmul.f32 %v687, %v729
      %v743 = vmul.f32 %v688, %v729
      %v744 = vmul.f32 %v690, %v729
      %v745 = vmul.f32 %v691, %v729
      %v746 = vmul.f32 %v693, %v729
      %v747 = vmul.f32 %v694, %v729
      %v748 = vmul.f32 %v696, %v729
      %v749 = vmul.f32 %v697, %v729
      %v750 = vmul.f32 %v699, %v729
      %v751 = vmul.f32 %v700, %v729
      %v752 = vmul.f32 %v702, %v729
      %v753 = vmul.f32 %v703, %v729
      %v754 = vmul.f32 %v705, %v729
      %v755 = vmul.f32 %v706, %v729
      %v756 = vmul.f32 %v708, %v729
      %v757 = vmul.f32 %v709, %v729
      %v758 = vmul.f32 %v711, %v729
      %v759 = vmul.f32 %v712, %v729
      %v760 = vmul.f32 %v714, %v729
      %v761 = vmul.f32 %v715, %v729
      %v762 = vadd.f32 %v727, %v730
      %v763 = vadd.f32 %v727, %v731
      %v764 = vadd.f32 %v727, %v732
      %v765 = vadd.f32 %v727, %v733
      %v766 = vadd.f32 %v727, %v734
      %v767 = vadd.f32 %v727, %v735
      %v768 = vadd.f32 %v727, %v736
      %v769 = vadd.f32 %v727, %v737
      %v770 = vadd.f32 %v727, %v738
      %v771 = vadd.f32 %v727, %v739
      %v772 = vadd.f32 %v727, %v740
      %v773 = vadd.f32 %v727, %v741
      %v774 = vadd.f32 %v727, %v742
      %v775 = vadd.f32 %v727, %v743
      %v776 = vadd.f32 %v727, %v744
      %v777 = vadd.f32 %v727, %v745
      %v778 = vadd.f32 %v727, %v746
      %v779 = vadd.f32 %v727, %v747
      %v780 = vadd.f32 %v727, %v748
      %v781 = vadd.f32 %v727, %v749
      %v782 = vadd.f32 %v727, %v750
      %v783 = vadd.f32 %v727, %v751
      %v784 = vadd.f32 %v727, %v752
      %v785 = vadd.f32 %v727, %v753
      %v786 = vadd.f32 %v727, %v754
      %v787 = vadd.f32 %v727, %v755
      %v788 = vadd.f32 %v727, %v756
      %v789 = vadd.f32 %v727, %v757
      %v790 = vadd.f32 %v727, %v758
      %v791 = vadd.f32 %v727, %v759
      %v792 = vadd.f32 %v727, %v760
      %v793 = vadd.f32 %v727, %v761
      %v794 = vperm.slane %v723, 3
      %v795 = vmul.f32 %v672, %v794
      %v796 = vmul.f32 %v673, %v794
      %v797 = vmul.f32 %v675, %v794
      %v798 = vmul.f32 %v676, %v794
      %v799 = vmul.f32 %v678, %v794
      %v800 = vmul.f32 %v679, %v794
      %v801 = vmul.f32 %v681, %v794
      %v802 = vmul.f32 %v682, %v794
      %v803 = vmul.f32 %v684, %v794
      %v804 = vmul.f32 %v685, %v794
      %v805 = vmul.f32 %v687, %v794
      %v806 = vmul.f32 %v688, %v794
      %v807 = vmul.f32 %v690, %v794
      %v808 = vmul.f32 %v691, %v794
      %v809 = vmul.f32 %v693, %v794
      %v810 = vmul.f32 %v694, %v794
      %v811 = vmul.f32 %v696, %v794
      %v812 = vmul.f32 %v697, %v794
      %v813 = vmul.f32 %v699, %v794
      %v814 = vmul.f32 %v700, %v794
      %v815 = vmul.f32 %v702, %v794
      %v816 = vmul.f32 %v703, %v794
      %v817 = vmul.f32 %v705, %v794
      %v818 = vmul.f32 %v706, %v794
      %v819 = vmul.f32 %v708, %v794
      %v820 = vmul.f32 %v709, %v794
      %v821 = vmul.f32 %v711, %v794
      %v822 = vmul.f32 %v712, %v794
      %v823 = vmul.f32 %v714, %v794
      %v824 = vmul.f32 %v715, %v794
      %v825 = vmul.f32 %v717, %v794
      %v826 = vmul.f32 %v718, %v794
      %v827 = vadd.f32 %v762, %v795
      %v828 = vadd.f32 %v763, %v796
      %v829 = vadd.f32 %v764, %v797
      %v830 = vadd.f32 %v765, %v798
      %v831 = vadd.f32 %v766, %v799
      %v832 = vadd.f32 %v767, %v800
      %v833 = vadd.f32 %v768, %v801
      %v834 = vadd.f32 %v769, %v802
      %v835 = vadd.f32 %v770, %v803
      %v836 = vadd.f32 %v771, %v804
      %v837 = vadd.f32 %v772, %v805
      %v838 = vadd.f32 %v773, %v806
      %v839 = vadd.f32 %v774, %v807
      %v840 = vadd.f32 %v775, %v808
      %v841 = vadd.f32 %v776, %v809
      %v842 = vadd.f32 %v777, %v810
      %v843 = vadd.f32 %v778, %v811
      %v844 = vadd.f32 %v779, %v812
      %v845 = vadd.f32 %v780, %v813
      %v846 = vadd.f32 %v781, %v814
      %v847 = vadd.f32 %v782, %v815
      %v848 = vadd.f32 %v783, %v816
      %v849 = vadd.f32 %v784, %v817
      %v850 = vadd.f32 %v785, %v818
      %v851 = vadd.f32 %v786, %v819
      %v852 = vadd.f32 %v787, %v820
      %v853 = vadd.f32 %v788, %v821
      %v854 = vadd.f32 %v789, %v822
      %v855 = vadd.f32 %v790, %v823
      %v856 = vadd.f32 %v791, %v824
      %v857 = vadd.f32 %v792, %v825
      %v858 = vadd.f32 %v793, %v826
      %v859 = vperm.slane %v723, 6
      %v860 = vmul.f32 %v675, %v859
      %v861 = vmul.f32 %v676, %v859
      %v862 = vmul.f32 %v678, %v859
      %v863 = vmul.f32 %v679, %v859
      %v864 = vmul.f32 %v681, %v859
      %v865 = vmul.f32 %v682, %v859
      %v866 = vmul.f32 %v684, %v859
      %v867 = vmul.f32 %v685, %v859
      %v868 = vmul.f32 %v687, %v859
      %v869 = vmul.f32 %v688, %v859
      %v870 = vmul.f32 %v690, %v859
      %v871 = vmul.f32 %v691, %v859
      %v872 = vmul.f32 %v693, %v859
      %v873 = vmul.f32 %v694, %v859
      %v874 = vmul.f32 %v696, %v859
      %v875 = vmul.f32 %v697, %v859
      %v876 = vmul.f32 %v699, %v859
      %v877 = vmul.f32 %v700, %v859
      %v878 = vmul.f32 %v702, %v859
      %v879 = vmul.f32 %v703, %v859
      %v880 = vmul.f32 %v705, %v859
      %v881 = vmul.f32 %v706, %v859
      %v882 = vmul.f32 %v708, %v859
      %v883 = vmul.f32 %v709, %v859
      %v884 = vmul.f32 %v711, %v859
      %v885 = vmul.f32 %v712, %v859
      %v886 = vmul.f32 %v714, %v859
      %v887 = vmul.f32 %v715, %v859
      %v888 = vmul.f32 %v717, %v859
      %v889 = vmul.f32 %v718, %v859
      %v890 = vmul.f32 %v720, %v859
      %v891 = vmul.f32 %v721, %v859
      %v892 = vadd.f32 %v827, %v860
      %v893 = vadd.f32 %v828, %v861
      %v894 = vadd.f32 %v829, %v862
      %v895 = vadd.f32 %v830, %v863
      %v896 = vadd.f32 %v831, %v864
      %v897 = vadd.f32 %v832, %v865
      %v898 = vadd.f32 %v833, %v866
      %v899 = vadd.f32 %v834, %v867
      %v900 = vadd.f32 %v835, %v868
      %v901 = vadd.f32 %v836, %v869
      %v902 = vadd.f32 %v837, %v870
      %v903 = vadd.f32 %v838, %v871
      %v904 = vadd.f32 %v839, %v872
      %v905 = vadd.f32 %v840, %v873
      %v906 = vadd.f32 %v841, %v874
      %v907 = vadd.f32 %v842, %v875
      %v908 = vadd.f32 %v843, %v876
      %v909 = vadd.f32 %v844, %v877
      %v910 = vadd.f32 %v845, %v878
      %v911 = vadd.f32 %v846, %v879
      %v912 = vadd.f32 %v847, %v880
      %v913 = vadd.f32 %v848, %v881
      %v914 = vadd.f32 %v849, %v882
      %v915 = vadd.f32 %v850, %v883
      %v916 = vadd.f32 %v851, %v884
      %v917 = vadd.f32 %v852, %v885
      %v918 = vadd.f32 %v853, %v886
      %v919 = vadd.f32 %v854, %v887
      %v920 = vadd.f32 %v855, %v888
      %v921 = vadd.f32 %v856, %v889
      %v922 = vadd.f32 %v857, %v890
      %v923 = vadd.f32 %v858, %v891
      %v924 = vperm.slane %v723, 1
      %v925 = vmul.f32 %v669, %v924
      %v926 = vmul.f32 %v670, %v924
      %v927 = vmul.f32 %v671, %v924
      %v928 = vmul.f32 %v672, %v924
      %v929 = vmul.f32 %v673, %v924
      %v930 = vmul.f32 %v674, %v924
      %v931 = vmul.f32 %v675, %v924
      %v932 = vmul.f32 %v676, %v924
      %v933 = vmul.f32 %v677, %v924
      %v934 = vmul.f32 %v678, %v924
      %v935 = vmul.f32 %v679, %v924
      %v936 = vmul.f32 %v680, %v924
      %v937 = vmul.f32 %v681, %v924
      %v938 = vmul.f32 %v682, %v924
      %v939 = vmul.f32 %v683, %v924
      %v940 = vmul.f32 %v684, %v924
      %v941 = vmul.f32 %v685, %v924
      %v942 = vmul.f32 %v686, %v924
      %v943 = vmul.f32 %v687, %v924
      %v944 = vmul.f32 %v688, %v924
      %v945 = vmul.f32 %v689, %v924
      %v946 = vmul.f32 %v690, %v924
      %v947 = vmul.f32 %v691, %v924
      %v948 = vmul.f32 %v692, %v924
      %v949 = vmul.f32 %v693, %v924
      %v950 = vmul.f32 %v694, %v924
      %v951 = vmul.f32 %v695, %v924
      %v952 = vmul.f32 %v696, %v924
      %v953 = vmul.f32 %v697, %v924
      %v954 = vmul.f32 %v698, %v924
      %v955 = vmul.f32 %v699, %v924
      %v956 = vmul.f32 %v700, %v924
      %v957 = vmul.f32 %v701, %v924
      %v958 = vmul.f32 %v702, %v924
      %v959 = vmul.f32 %v703, %v924
      %v960 = vmul.f32 %v704, %v924
      %v961 = vmul.f32 %v705, %v924
      %v962 = vmul.f32 %v706, %v924
      %v963 = vmul.f32 %v707, %v924
      %v964 = vmul.f32 %v708, %v924
      %v965 = vmul.f32 %v709, %v924
      %v966 = vmul.f32 %v710, %v924
      %v967 = vmul.f32 %v711, %v924
      %v968 = vmul.f32 %v712, %v924
      %v969 = vmul.f32 %v713, %v924
      %v970 = vmul.f32 %v714, %v924
      %v971 = vmul.f32 %v715, %v924
      %v972 = vmul.f32 %v716, %v924
      %vm1021 = vcmask 1046528
      %v1022 = vrot.slane %v925, 1
      %v1023 = vrot.slane %v926, 1
      %v1024 = vsel %vm1021, %v1022, %v1023
      %v1025 = vrot.slane %v927, 1
      %v1026 = vsel %vm1021, %v1023, %v1025
      %v1027 = vrot.slane %v928, 1
      %v1028 = vrot.slane %v929, 1
      %v1029 = vsel %vm1021, %v1027, %v1028
      %v1030 = vrot.slane %v930, 1
      %v1031 = vsel %vm1021, %v1028, %v1030
      %v1032 = vrot.slane %v931, 1
      %v1033 = vrot.slane %v932, 1
      %v1034 = vsel %vm1021, %v1032, %v1033
      %v1035 = vrot.slane %v933, 1
      %v1036 = vsel %vm1021, %v1033, %v1035
      %v1037 = vrot.slane %v934, 1
      %v1038 = vrot.slane %v935, 1
      %v1039 = vsel %vm1021, %v1037, %v1038
      %v1040 = vrot.slane %v936, 1
      %v1041 = vsel %vm1021, %v1038, %v1040
      %v1042 = vrot.slane %v937, 1
      %v1043 = vrot.slane %v938, 1
      %v1044 = vsel %vm1021, %v1042, %v1043
      %v1045 = vrot.slane %v939, 1
      %v1046 = vsel %vm1021, %v1043, %v1045
      %v1047 = vrot.slane %v940, 1
      %v1048 = vrot.slane %v941, 1
      %v1049 = vsel %vm1021, %v1047, %v1048
      %v1050 = vrot.slane %v942, 1
      %v1051 = vsel %vm1021, %v1048, %v1050
      %v1052 = vrot.slane %v943, 1
      %v1053 = vrot.slane %v944, 1
      %v1054 = vsel %vm1021, %v1052, %v1053
      %v1055 = vrot.slane %v945, 1
      %v1056 = vsel %vm1021, %v1053, %v1055
      %v1057 = vrot.slane %v946, 1
      %v1058 = vrot.slane %v947, 1
      %v1059 = vsel %vm1021, %v1057, %v1058
      %v1060 = vrot.slane %v948, 1
      %v1061 = vsel %vm1021, %v1058, %v1060
      %v1062 = vrot.slane %v949, 1
      %v1063 = vrot.slane %v950, 1
      %v1064 = vsel %vm1021, %v1062, %v1063
      %v1065 = vrot.slane %v951, 1
      %v1066 = vsel %vm1021, %v1063, %v1065
      %v1067 = vrot.slane %v952, 1
      %v1068 = vrot.slane %v953, 1
      %v1069 = vsel %vm1021, %v1067, %v1068
      %v1070 = vrot.slane %v954, 1
      %v1071 = vsel %vm1021, %v1068, %v1070
      %v1072 = vrot.slane %v955, 1
      %v1073 = vrot.slane %v956, 1
      %v1074 = vsel %vm1021, %v1072, %v1073
      %v1075 = vrot.slane %v957, 1
      %v1076 = vsel %vm1021, %v1073, %v1075
      %v1077 = vrot.slane %v958, 1
      %v1078 = vrot.slane %v959, 1
      %v1079 = vsel %vm1021, %v1077, %v1078
      %v1080 = vrot.slane %v960, 1
      %v1081 = vsel %vm1021, %v1078, %v1080
      %v1082 = vrot.slane %v961, 1
      %v1083 = vrot.slane %v962, 1
      %v1084 = vsel %vm1021, %v1082, %v1083
      %v1085 = vrot.slane %v963, 1
      %v1086 = vsel %vm1021, %v1083, %v1085
      %v1087 = vrot.slane %v964, 1
      %v1088 = vrot.slane %v965, 1
      %v1089 = vsel %vm1021, %v1087, %v1088
      %v1090 = vrot.slane %v966, 1
      %v1091 = vsel %vm1021, %v1088, %v1090
      %v1092 = vrot.slane %v967, 1
      %v1093 = vrot.slane %v968, 1
      %v1094 = vsel %vm1021, %v1092, %v1093
      %v1095 = vrot.slane %v969, 1
      %v1096 = vsel %vm1021, %v1093, %v1095
      %v1097 = vrot.slane %v970, 1
      %v1098 = vrot.slane %v971, 1
      %v1099 = vsel %vm1021, %v1097, %v1098
      %v1100 = vrot.slane %v972, 1
      %v1101 = vsel %vm1021, %v1098, %v1100
      %v1134 = vadd.f32 %v892, %v1024
      %v1135 = vadd.f32 %v893, %v1026
      %v1136 = vadd.f32 %v894, %v1029
      %v1137 = vadd.f32 %v895, %v1031
      %v1138 = vadd.f32 %v896, %v1034
      %v1139 = vadd.f32 %v897, %v1036
      %v1140 = vadd.f32 %v898, %v1039
      %v1141 = vadd.f32 %v899, %v1041
      %v1142 = vadd.f32 %v900, %v1044
      %v1143 = vadd.f32 %v901, %v1046
      %v1144 = vadd.f32 %v902, %v1049
      %v1145 = vadd.f32 %v903, %v1051
      %v1146 = vadd.f32 %v904, %v1054
      %v1147 = vadd.f32 %v905, %v1056
      %v1148 = vadd.f32 %v906, %v1059
      %v1149 = vadd.f32 %v907, %v1061
      %v1150 = vadd.f32 %v908, %v1064
      %v1151 = vadd.f32 %v909, %v1066
      %v1152 = vadd.f32 %v910, %v1069
      %v1153 = vadd.f32 %v911, %v1071
      %v1154 = vadd.f32 %v912, %v1074
      %v1155 = vadd.f32 %v913, %v1076
      %v1156 = vadd.f32 %v914, %v1079
      %v1157 = vadd.f32 %v915, %v1081
      %v1158 = vadd.f32 %v916, %v1084
      %v1159 = vadd.f32 %v917, %v1086
      %v1160 = vadd.f32 %v918, %v1089
      %v1161 = vadd.f32 %v919, %v1091
      %v1162 = vadd.f32 %v920, %v1094
      %v1163 = vadd.f32 %v921, %v1096
      %v1164 = vadd.f32 %v922, %v1099
      %v1165 = vadd.f32 %v923, %v1101
      %v1166 = vperm.slane %v723, 4
      %v1167 = vmul.f32 %v672, %v1166
      %v1168 = vmul.f32 %v673, %v1166
      %v1169 = vmul.f32 %v674, %v1166
      %v1170 = vmul.f32 %v675, %v1166
      %v1171 = vmul.f32 %v676, %v1166
      %v1172 = vmul.f32 %v677, %v1166
      %v1173 = vmul.f32 %v678, %v1166
      %v1174 = vmul.f32 %v679, %v1166
      %v1175 = vmul.f32 %v680, %v1166
      %v1176 = vmul.f32 %v681, %v1166
      %v1177 = vmul.f32 %v682, %v1166
      %v1178 = vmul.f32 %v683, %v1166
      %v1179 = vmul.f32 %v684, %v1166
      %v1180 = vmul.f32 %v685, %v1166
      %v1181 = vmul.f32 %v686, %v1166
      %v1182 = vmul.f32 %v687, %v1166
      %v1183 = vmul.f32 %v688, %v1166
      %v1184 = vmul.f32 %v689, %v1166
      %v1185 = vmul.f32 %v690, %v1166
      %v1186 = vmul.f32 %v691, %v1166
      %v1187 = vmul.f32 %v692, %v1166
      %v1188 = vmul.f32 %v693, %v1166
      %v1189 = vmul.f32 %v694, %v1166
      %v1190 = vmul.f32 %v695, %v1166
      %v1191 = vmul.f32 %v696, %v1166
      %v1192 = vmul.f32 %v697, %v1166
      %v1193 = vmul.f32 %v698, %v1166
      %v1194 = vmul.f32 %v699, %v1166
      %v1195 = vmul.f32 %v700, %v1166
      %v1196 = vmul.f32 %v701, %v1166
      %v1197 = vmul.f32 %v702, %v1166
      %v1198 = vmul.f32 %v703, %v1166
      %v1199 = vmul.f32 %v704, %v1166
      %v1200 = vmul.f32 %v705, %v1166
      %v1201 = vmul.f32 %v706, %v1166
      %v1202 = vmul.f32 %v707, %v1166
      %v1203 = vmul.f32 %v708, %v1166
      %v1204 = vmul.f32 %v709, %v1166
      %v1205 = vmul.f32 %v710, %v1166
      %v1206 = vmul.f32 %v711, %v1166
      %v1207 = vmul.f32 %v712, %v1166
      %v1208 = vmul.f32 %v713, %v1166
      %v1209 = vmul.f32 %v714, %v1166
      %v1210 = vmul.f32 %v715, %v1166
      %v1211 = vmul.f32 %v716, %v1166
      %v1212 = vmul.f32 %v717, %v1166
      %v1213 = vmul.f32 %v718, %v1166
      %v1214 = vmul.f32 %v719, %v1166
      %v1263 = vrot.slane %v1167, 1
      %v1264 = vrot.slane %v1168, 1
      %v1265 = vsel %vm1021, %v1263, %v1264
      %v1266 = vrot.slane %v1169, 1
      %v1267 = vsel %vm1021, %v1264, %v1266
      %v1268 = vrot.slane %v1170, 1
      %v1269 = vrot.slane %v1171, 1
      %v1270 = vsel %vm1021, %v1268, %v1269
      %v1271 = vrot.slane %v1172, 1
      %v1272 = vsel %vm1021, %v1269, %v1271
      %v1273 = vrot.slane %v1173, 1
      %v1274 = vrot.slane %v1174, 1
      %v1275 = vsel %vm1021, %v1273, %v1274
      %v1276 = vrot.slane %v1175, 1
      %v1277 = vsel %vm1021, %v1274, %v1276
      %v1278 = vrot.slane %v1176, 1
      %v1279 = vrot.slane %v1177, 1
      %v1280 = vsel %vm1021, %v1278, %v1279
      %v1281 = vrot.slane %v1178, 1
      %v1282 = vsel %vm1021, %v1279, %v1281
      %v1283 = vrot.slane %v1179, 1
      %v1284 = vrot.slane %v1180, 1
      %v1285 = vsel %vm1021, %v1283, %v1284
      %v1286 = vrot.slane %v1181, 1
      %v1287 = vsel %vm1021, %v1284, %v1286
      %v1288 = vrot.slane %v1182, 1
      %v1289 = vrot.slane %v1183, 1
      %v1290 = vsel %vm1021, %v1288, %v1289
      %v1291 = vrot.slane %v1184, 1
      %v1292 = vsel %vm1021, %v1289, %v1291
      %v1293 = vrot.slane %v1185, 1
      %v1294 = vrot.slane %v1186, 1
      %v1295 = vsel %vm1021, %v1293, %v1294
      %v1296 = vrot.slane %v1187, 1
      %v1297 = vsel %vm1021, %v1294, %v1296
      %v1298 = vrot.slane %v1188, 1
      %v1299 = vrot.slane %v1189, 1
      %v1300 = vsel %vm1021, %v1298, %v1299
      %v1301 = vrot.slane %v1190, 1
      %v1302 = vsel %vm1021, %v1299, %v1301
      %v1303 = vrot.slane %v1191, 1
      %v1304 = vrot.slane %v1192, 1
      %v1305 = vsel %vm1021, %v1303, %v1304
      %v1306 = vrot.slane %v1193, 1
      %v1307 = vsel %vm1021, %v1304, %v1306
      %v1308 = vrot.slane %v1194, 1
      %v1309 = vrot.slane %v1195, 1
      %v1310 = vsel %vm1021, %v1308, %v1309
      %v1311 = vrot.slane %v1196, 1
      %v1312 = vsel %vm1021, %v1309, %v1311
      %v1313 = vrot.slane %v1197, 1
      %v1314 = vrot.slane %v1198, 1
      %v1315 = vsel %vm1021, %v1313, %v1314
      %v1316 = vrot.slane %v1199, 1
      %v1317 = vsel %vm1021, %v1314, %v1316
      %v1318 = vrot.slane %v1200, 1
      %v1319 = vrot.slane %v1201, 1
      %v1320 = vsel %vm1021, %v1318, %v1319
      %v1321 = vrot.slane %v1202, 1
      %v1322 = vsel %vm1021, %v1319, %v1321
      %v1323 = vrot.slane %v1203, 1
      %v1324 = vrot.slane %v1204, 1
      %v1325 = vsel %vm1021, %v1323, %v1324
      %v1326 = vrot.slane %v1205, 1
      %v1327 = vsel %vm1021, %v1324, %v1326
      %v1328 = vrot.slane %v1206, 1
      %v1329 = vrot.slane %v1207, 1
      %v1330 = vsel %vm1021, %v1328, %v1329
      %v1331 = vrot.slane %v1208, 1
      %v1332 = vsel %vm1021, %v1329, %v1331
      %v1333 = vrot.slane %v1209, 1
      %v1334 = vrot.slane %v1210, 1
      %v1335 = vsel %vm1021, %v1333, %v1334
      %v1336 = vrot.slane %v1211, 1
      %v1337 = vsel %vm1021, %v1334, %v1336
      %v1338 = vrot.slane %v1212, 1
      %v1339 = vrot.slane %v1213, 1
      %v1340 = vsel %vm1021, %v1338, %v1339
      %v1341 = vrot.slane %v1214, 1
      %v1342 = vsel %vm1021, %v1339, %v1341
      %v1375 = vadd.f32 %v1134, %v1265
      %v1376 = vadd.f32 %v1135, %v1267
      %v1377 = vadd.f32 %v1136, %v1270
      %v1378 = vadd.f32 %v1137, %v1272
      %v1379 = vadd.f32 %v1138, %v1275
      %v1380 = vadd.f32 %v1139, %v1277
      %v1381 = vadd.f32 %v1140, %v1280
      %v1382 = vadd.f32 %v1141, %v1282
      %v1383 = vadd.f32 %v1142, %v1285
      %v1384 = vadd.f32 %v1143, %v1287
      %v1385 = vadd.f32 %v1144, %v1290
      %v1386 = vadd.f32 %v1145, %v1292
      %v1387 = vadd.f32 %v1146, %v1295
      %v1388 = vadd.f32 %v1147, %v1297
      %v1389 = vadd.f32 %v1148, %v1300
      %v1390 = vadd.f32 %v1149, %v1302
      %v1391 = vadd.f32 %v1150, %v1305
      %v1392 = vadd.f32 %v1151, %v1307
      %v1393 = vadd.f32 %v1152, %v1310
      %v1394 = vadd.f32 %v1153, %v1312
      %v1395 = vadd.f32 %v1154, %v1315
      %v1396 = vadd.f32 %v1155, %v1317
      %v1397 = vadd.f32 %v1156, %v1320
      %v1398 = vadd.f32 %v1157, %v1322
      %v1399 = vadd.f32 %v1158, %v1325
      %v1400 = vadd.f32 %v1159, %v1327
      %v1401 = vadd.f32 %v1160, %v1330
      %v1402 = vadd.f32 %v1161, %v1332
      %v1403 = vadd.f32 %v1162, %v1335
      %v1404 = vadd.f32 %v1163, %v1337
      %v1405 = vadd.f32 %v1164, %v1340
      %v1406 = vadd.f32 %v1165, %v1342
      %v1407 = vperm.slane %v723, 7
      %v1408 = vmul.f32 %v675, %v1407
      %v1409 = vmul.f32 %v676, %v1407
      %v1410 = vmul.f32 %v677, %v1407
      %v1411 = vmul.f32 %v678, %v1407
      %v1412 = vmul.f32 %v679, %v1407
      %v1413 = vmul.f32 %v680, %v1407
      %v1414 = vmul.f32 %v681, %v1407
      %v1415 = vmul.f32 %v682, %v1407
      %v1416 = vmul.f32 %v683, %v1407
      %v1417 = vmul.f32 %v684, %v1407
      %v1418 = vmul.f32 %v685, %v1407
      %v1419 = vmul.f32 %v686, %v1407
      %v1420 = vmul.f32 %v687, %v1407
      %v1421 = vmul.f32 %v688, %v1407
      %v1422 = vmul.f32 %v689, %v1407
      %v1423 = vmul.f32 %v690, %v1407
      %v1424 = vmul.f32 %v691, %v1407
      %v1425 = vmul.f32 %v692, %v1407
      %v1426 = vmul.f32 %v693, %v1407
      %v1427 = vmul.f32 %v694, %v1407
      %v1428 = vmul.f32 %v695, %v1407
      %v1429 = vmul.f32 %v696, %v1407
      %v1430 = vmul.f32 %v697, %v1407
      %v1431 = vmul.f32 %v698, %v1407
      %v1432 = vmul.f32 %v699, %v1407
      %v1433 = vmul.f32 %v700, %v1407
      %v1434 = vmul.f32 %v701, %v1407
      %v1435 = vmul.f32 %v702, %v1407
      %v1436 = vmul.f32 %v703, %v1407
      %v1437 = vmul.f32 %v704, %v1407
      %v1438 = vmul.f32 %v705, %v1407
      %v1439 = vmul.f32 %v706, %v1407
      %v1440 = vmul.f32 %v707, %v1407
      %v1441 = vmul.f32 %v708, %v1407
      %v1442 = vmul.f32 %v709, %v1407
      %v1443 = vmul.f32 %v710, %v1407
      %v1444 = vmul.f32 %v711, %v1407
      %v1445 = vmul.f32 %v712, %v1407
      %v1446 = vmul.f32 %v713, %v1407
      %v1447 = vmul.f32 %v714, %v1407
      %v1448 = vmul.f32 %v715, %v1407
      %v1449 = vmul.f32 %v716, %v1407
      %v1450 = vmul.f32 %v717, %v1407
      %v1451 = vmul.f32 %v718, %v1407
      %v1452 = vmul.f32 %v719, %v1407
      %v1453 = vmul.f32 %v720, %v1407
      %v1454 = vmul.f32 %v721, %v1407
      %v1455 = vmul.f32 %v722, %v1407
      %v1504 = vrot.slane %v1408, 1
      %v1505 = vrot.slane %v1409, 1
      %v1506 = vsel %vm1021, %v1504, %v1505
      %v1507 = vrot.slane %v1410, 1
      %v1508 = vsel %vm1021, %v1505, %v1507
      %v1509 = vrot.slane %v1411, 1
      %v1510 = vrot.slane %v1412, 1
      %v1511 = vsel %vm1021, %v1509, %v1510
      %v1512 = vrot.slane %v1413, 1
      %v1513 = vsel %vm1021, %v1510, %v1512
      %v1514 = vrot.slane %v1414, 1
      %v1515 = vrot.slane %v1415, 1
      %v1516 = vsel %vm1021, %v1514, %v1515
      %v1517 = vrot.slane %v1416, 1
      %v1518 = vsel %vm1021, %v1515, %v1517
      %v1519 = vrot.slane %v1417, 1
      %v1520 = vrot.slane %v1418, 1
      %v1521 = vsel %vm1021, %v1519, %v1520
      %v1522 = vrot.slane %v1419, 1
      %v1523 = vsel %vm1021, %v1520, %v1522
      %v1524 = vrot.slane %v1420, 1
      %v1525 = vrot.slane %v1421, 1
      %v1526 = vsel %vm1021, %v1524, %v1525
      %v1527 = vrot.slane %v1422, 1
      %v1528 = vsel %vm1021, %v1525, %v1527
      %v1529 = vrot.slane %v1423, 1
      %v1530 = vrot.slane %v1424, 1
      %v1531 = vsel %vm1021, %v1529, %v1530
      %v1532 = vrot.slane %v1425, 1
      %v1533 = vsel %vm1021, %v1530, %v1532
      %v1534 = vrot.slane %v1426, 1
      %v1535 = vrot.slane %v1427, 1
      %v1536 = vsel %vm1021, %v1534, %v1535
      %v1537 = vrot.slane %v1428, 1
      %v1538 = vsel %vm1021, %v1535, %v1537
      %v1539 = vrot.slane %v1429, 1
      %v1540 = vrot.slane %v1430, 1
      %v1541 = vsel %vm1021, %v1539, %v1540
      %v1542 = vrot.slane %v1431, 1
      %v1543 = vsel %vm1021, %v1540, %v1542
      %v1544 = vrot.slane %v1432, 1
      %v1545 = vrot.slane %v1433, 1
      %v1546 = vsel %vm1021, %v1544, %v1545
      %v1547 = vrot.slane %v1434, 1
      %v1548 = vsel %vm1021, %v1545, %v1547
      %v1549 = vrot.slane %v1435, 1
      %v1550 = vrot.slane %v1436, 1
      %v1551 = vsel %vm1021, %v1549, %v1550
      %v1552 = vrot.slane %v1437, 1
      %v1553 = vsel %vm1021, %v1550, %v1552
      %v1554 = vrot.slane %v1438, 1
      %v1555 = vrot.slane %v1439, 1
      %v1556 = vsel %vm1021, %v1554, %v1555
      %v1557 = vrot.slane %v1440, 1
      %v1558 = vsel %vm1021, %v1555, %v1557
      %v1559 = vrot.slane %v1441, 1
      %v1560 = vrot.slane %v1442, 1
      %v1561 = vsel %vm1021, %v1559, %v1560
      %v1562 = vrot.slane %v1443, 1
      %v1563 = vsel %vm1021, %v1560, %v1562
      %v1564 = vrot.slane %v1444, 1
      %v1565 = vrot.slane %v1445, 1
      %v1566 = vsel %vm1021, %v1564, %v1565
      %v1567 = vrot.slane %v1446, 1
      %v1568 = vsel %vm1021, %v1565, %v1567
      %v1569 = vrot.slane %v1447, 1
      %v1570 = vrot.slane %v1448, 1
      %v1571 = vsel %vm1021, %v1569, %v1570
      %v1572 = vrot.slane %v1449, 1
      %v1573 = vsel %vm1021, %v1570, %v1572
      %v1574 = vrot.slane %v1450, 1
      %v1575 = vrot.slane %v1451, 1
      %v1576 = vsel %vm1021, %v1574, %v1575
      %v1577 = vrot.slane %v1452, 1
      %v1578 = vsel %vm1021, %v1575, %v1577
      %v1579 = vrot.slane %v1453, 1
      %v1580 = vrot.slane %v1454, 1
      %v1581 = vsel %vm1021, %v1579, %v1580
      %v1582 = vrot.slane %v1455, 1
      %v1583 = vsel %vm1021, %v1580, %v1582
      %v1616 = vadd.f32 %v1375, %v1506
      %v1617 = vadd.f32 %v1376, %v1508
      %v1618 = vadd.f32 %v1377, %v1511
      %v1619 = vadd.f32 %v1378, %v1513
      %v1620 = vadd.f32 %v1379, %v1516
      %v1621 = vadd.f32 %v1380, %v1518
      %v1622 = vadd.f32 %v1381, %v1521
      %v1623 = vadd.f32 %v1382, %v1523
      %v1624 = vadd.f32 %v1383, %v1526
      %v1625 = vadd.f32 %v1384, %v1528
      %v1626 = vadd.f32 %v1385, %v1531
      %v1627 = vadd.f32 %v1386, %v1533
      %v1628 = vadd.f32 %v1387, %v1536
      %v1629 = vadd.f32 %v1388, %v1538
      %v1630 = vadd.f32 %v1389, %v1541
      %v1631 = vadd.f32 %v1390, %v1543
      %v1632 = vadd.f32 %v1391, %v1546
      %v1633 = vadd.f32 %v1392, %v1548
      %v1634 = vadd.f32 %v1393, %v1551
      %v1635 = vadd.f32 %v1394, %v1553
      %v1636 = vadd.f32 %v1395, %v1556
      %v1637 = vadd.f32 %v1396, %v1558
      %v1638 = vadd.f32 %v1397, %v1561
      %v1639 = vadd.f32 %v1398, %v1563
      %v1640 = vadd.f32 %v1399, %v1566
      %v1641 = vadd.f32 %v1400, %v1568
      %v1642 = vadd.f32 %v1401, %v1571
      %v1643 = vadd.f32 %v1402, %v1573
      %v1644 = vadd.f32 %v1403, %v1576
      %v1645 = vadd.f32 %v1404, %v1578
      %v1646 = vadd.f32 %v1405, %v1581
      %v1647 = vadd.f32 %v1406, %v1583
      %v1648 = vperm.slane %v723, 2
      %v1649 = vmul.f32 %v669, %v1648
      %v1650 = vmul.f32 %v670, %v1648
      %v1651 = vmul.f32 %v671, %v1648
      %v1652 = vmul.f32 %v672, %v1648
      %v1653 = vmul.f32 %v673, %v1648
      %v1654 = vmul.f32 %v674, %v1648
      %v1655 = vmul.f32 %v675, %v1648
      %v1656 = vmul.f32 %v676, %v1648
      %v1657 = vmul.f32 %v677, %v1648
      %v1658 = vmul.f32 %v678, %v1648
      %v1659 = vmul.f32 %v679, %v1648
      %v1660 = vmul.f32 %v680, %v1648
      %v1661 = vmul.f32 %v681, %v1648
      %v1662 = vmul.f32 %v682, %v1648
      %v1663 = vmul.f32 %v683, %v1648
      %v1664 = vmul.f32 %v684, %v1648
      %v1665 = vmul.f32 %v685, %v1648
      %v1666 = vmul.f32 %v686, %v1648
      %v1667 = vmul.f32 %v687, %v1648
      %v1668 = vmul.f32 %v688, %v1648
      %v1669 = vmul.f32 %v689, %v1648
      %v1670 = vmul.f32 %v690, %v1648
      %v1671 = vmul.f32 %v691, %v1648
      %v1672 = vmul.f32 %v692, %v1648
      %v1673 = vmul.f32 %v693, %v1648
      %v1674 = vmul.f32 %v694, %v1648
      %v1675 = vmul.f32 %v695, %v1648
      %v1676 = vmul.f32 %v696, %v1648
      %v1677 = vmul.f32 %v697, %v1648
      %v1678 = vmul.f32 %v698, %v1648
      %v1679 = vmul.f32 %v699, %v1648
      %v1680 = vmul.f32 %v700, %v1648
      %v1681 = vmul.f32 %v701, %v1648
      %v1682 = vmul.f32 %v702, %v1648
      %v1683 = vmul.f32 %v703, %v1648
      %v1684 = vmul.f32 %v704, %v1648
      %v1685 = vmul.f32 %v705, %v1648
      %v1686 = vmul.f32 %v706, %v1648
      %v1687 = vmul.f32 %v707, %v1648
      %v1688 = vmul.f32 %v708, %v1648
      %v1689 = vmul.f32 %v709, %v1648
      %v1690 = vmul.f32 %v710, %v1648
      %v1691 = vmul.f32 %v711, %v1648
      %v1692 = vmul.f32 %v712, %v1648
      %v1693 = vmul.f32 %v713, %v1648
      %v1694 = vmul.f32 %v714, %v1648
      %v1695 = vmul.f32 %v715, %v1648
      %v1696 = vmul.f32 %v716, %v1648
      %vm1745 = vcmask 1045504
      %v1746 = vrot.slane %v1649, 2
      %v1747 = vrot.slane %v1650, 2
      %v1748 = vsel %vm1745, %v1746, %v1747
      %v1749 = vrot.slane %v1651, 2
      %v1750 = vsel %vm1745, %v1747, %v1749
      %v1751 = vrot.slane %v1652, 2
      %v1752 = vrot.slane %v1653, 2
      %v1753 = vsel %vm1745, %v1751, %v1752
      %v1754 = vrot.slane %v1654, 2
      %v1755 = vsel %vm1745, %v1752, %v1754
      %v1756 = vrot.slane %v1655, 2
      %v1757 = vrot.slane %v1656, 2
      %v1758 = vsel %vm1745, %v1756, %v1757
      %v1759 = vrot.slane %v1657, 2
      %v1760 = vsel %vm1745, %v1757, %v1759
      %v1761 = vrot.slane %v1658, 2
      %v1762 = vrot.slane %v1659, 2
      %v1763 = vsel %vm1745, %v1761, %v1762
      %v1764 = vrot.slane %v1660, 2
      %v1765 = vsel %vm1745, %v1762, %v1764
      %v1766 = vrot.slane %v1661, 2
      %v1767 = vrot.slane %v1662, 2
      %v1768 = vsel %vm1745, %v1766, %v1767
      %v1769 = vrot.slane %v1663, 2
      %v1770 = vsel %vm1745, %v1767, %v1769
      %v1771 = vrot.slane %v1664, 2
      %v1772 = vrot.slane %v1665, 2
      %v1773 = vsel %vm1745, %v1771, %v1772
      %v1774 = vrot.slane %v1666, 2
      %v1775 = vsel %vm1745, %v1772, %v1774
      %v1776 = vrot.slane %v1667, 2
      %v1777 = vrot.slane %v1668, 2
      %v1778 = vsel %vm1745, %v1776, %v1777
      %v1779 = vrot.slane %v1669, 2
      %v1780 = vsel %vm1745, %v1777, %v1779
      %v1781 = vrot.slane %v1670, 2
      %v1782 = vrot.slane %v1671, 2
      %v1783 = vsel %vm1745, %v1781, %v1782
      %v1784 = vrot.slane %v1672, 2
      %v1785 = vsel %vm1745, %v1782, %v1784
      %v1786 = vrot.slane %v1673, 2
      %v1787 = vrot.slane %v1674, 2
      %v1788 = vsel %vm1745, %v1786, %v1787
      %v1789 = vrot.slane %v1675, 2
      %v1790 = vsel %vm1745, %v1787, %v1789
      %v1791 = vrot.slane %v1676, 2
      %v1792 = vrot.slane %v1677, 2
      %v1793 = vsel %vm1745, %v1791, %v1792
      %v1794 = vrot.slane %v1678, 2
      %v1795 = vsel %vm1745, %v1792, %v1794
      %v1796 = vrot.slane %v1679, 2
      %v1797 = vrot.slane %v1680, 2
      %v1798 = vsel %vm1745, %v1796, %v1797
      %v1799 = vrot.slane %v1681, 2
      %v1800 = vsel %vm1745, %v1797, %v1799
      %v1801 = vrot.slane %v1682, 2
      %v1802 = vrot.slane %v1683, 2
      %v1803 = vsel %vm1745, %v1801, %v1802
      %v1804 = vrot.slane %v1684, 2
      %v1805 = vsel %vm1745, %v1802, %v1804
      %v1806 = vrot.slane %v1685, 2
      %v1807 = vrot.slane %v1686, 2
      %v1808 = vsel %vm1745, %v1806, %v1807
      %v1809 = vrot.slane %v1687, 2
      %v1810 = vsel %vm1745, %v1807, %v1809
      %v1811 = vrot.slane %v1688, 2
      %v1812 = vrot.slane %v1689, 2
      %v1813 = vsel %vm1745, %v1811, %v1812
      %v1814 = vrot.slane %v1690, 2
      %v1815 = vsel %vm1745, %v1812, %v1814
      %v1816 = vrot.slane %v1691, 2
      %v1817 = vrot.slane %v1692, 2
      %v1818 = vsel %vm1745, %v1816, %v1817
      %v1819 = vrot.slane %v1693, 2
      %v1820 = vsel %vm1745, %v1817, %v1819
      %v1821 = vrot.slane %v1694, 2
      %v1822 = vrot.slane %v1695, 2
      %v1823 = vsel %vm1745, %v1821, %v1822
      %v1824 = vrot.slane %v1696, 2
      %v1825 = vsel %vm1745, %v1822, %v1824
      %v1858 = vadd.f32 %v1616, %v1748
      %v1859 = vadd.f32 %v1617, %v1750
      %v1860 = vadd.f32 %v1618, %v1753
      %v1861 = vadd.f32 %v1619, %v1755
      %v1862 = vadd.f32 %v1620, %v1758
      %v1863 = vadd.f32 %v1621, %v1760
      %v1864 = vadd.f32 %v1622, %v1763
      %v1865 = vadd.f32 %v1623, %v1765
      %v1866 = vadd.f32 %v1624, %v1768
      %v1867 = vadd.f32 %v1625, %v1770
      %v1868 = vadd.f32 %v1626, %v1773
      %v1869 = vadd.f32 %v1627, %v1775
      %v1870 = vadd.f32 %v1628, %v1778
      %v1871 = vadd.f32 %v1629, %v1780
      %v1872 = vadd.f32 %v1630, %v1783
      %v1873 = vadd.f32 %v1631, %v1785
      %v1874 = vadd.f32 %v1632, %v1788
      %v1875 = vadd.f32 %v1633, %v1790
      %v1876 = vadd.f32 %v1634, %v1793
      %v1877 = vadd.f32 %v1635, %v1795
      %v1878 = vadd.f32 %v1636, %v1798
      %v1879 = vadd.f32 %v1637, %v1800
      %v1880 = vadd.f32 %v1638, %v1803
      %v1881 = vadd.f32 %v1639, %v1805
      %v1882 = vadd.f32 %v1640, %v1808
      %v1883 = vadd.f32 %v1641, %v1810
      %v1884 = vadd.f32 %v1642, %v1813
      %v1885 = vadd.f32 %v1643, %v1815
      %v1886 = vadd.f32 %v1644, %v1818
      %v1887 = vadd.f32 %v1645, %v1820
      %v1888 = vadd.f32 %v1646, %v1823
      %v1889 = vadd.f32 %v1647, %v1825
      %v1890 = vperm.slane %v723, 5
      %v1891 = vmul.f32 %v672, %v1890
      %v1892 = vmul.f32 %v673, %v1890
      %v1893 = vmul.f32 %v674, %v1890
      %v1894 = vmul.f32 %v675, %v1890
      %v1895 = vmul.f32 %v676, %v1890
      %v1896 = vmul.f32 %v677, %v1890
      %v1897 = vmul.f32 %v678, %v1890
      %v1898 = vmul.f32 %v679, %v1890
      %v1899 = vmul.f32 %v680, %v1890
      %v1900 = vmul.f32 %v681, %v1890
      %v1901 = vmul.f32 %v682, %v1890
      %v1902 = vmul.f32 %v683, %v1890
      %v1903 = vmul.f32 %v684, %v1890
      %v1904 = vmul.f32 %v685, %v1890
      %v1905 = vmul.f32 %v686, %v1890
      %v1906 = vmul.f32 %v687, %v1890
      %v1907 = vmul.f32 %v688, %v1890
      %v1908 = vmul.f32 %v689, %v1890
      %v1909 = vmul.f32 %v690, %v1890
      %v1910 = vmul.f32 %v691, %v1890
      %v1911 = vmul.f32 %v692, %v1890
      %v1912 = vmul.f32 %v693, %v1890
      %v1913 = vmul.f32 %v694, %v1890
      %v1914 = vmul.f32 %v695, %v1890
      %v1915 = vmul.f32 %v696, %v1890
      %v1916 = vmul.f32 %v697, %v1890
      %v1917 = vmul.f32 %v698, %v1890
      %v1918 = vmul.f32 %v699, %v1890
      %v1919 = vmul.f32 %v700, %v1890
      %v1920 = vmul.f32 %v701, %v1890
      %v1921 = vmul.f32 %v702, %v1890
      %v1922 = vmul.f32 %v703, %v1890
      %v1923 = vmul.f32 %v704, %v1890
      %v1924 = vmul.f32 %v705, %v1890
      %v1925 = vmul.f32 %v706, %v1890
      %v1926 = vmul.f32 %v707, %v1890
      %v1927 = vmul.f32 %v708, %v1890
      %v1928 = vmul.f32 %v709, %v1890
      %v1929 = vmul.f32 %v710, %v1890
      %v1930 = vmul.f32 %v711, %v1890
      %v1931 = vmul.f32 %v712, %v1890
      %v1932 = vmul.f32 %v713, %v1890
      %v1933 = vmul.f32 %v714, %v1890
      %v1934 = vmul.f32 %v715, %v1890
      %v1935 = vmul.f32 %v716, %v1890
      %v1936 = vmul.f32 %v717, %v1890
      %v1937 = vmul.f32 %v718, %v1890
      %v1938 = vmul.f32 %v719, %v1890
      %v1987 = vrot.slane %v1891, 2
      %v1988 = vrot.slane %v1892, 2
      %v1989 = vsel %vm1745, %v1987, %v1988
      %v1990 = vrot.slane %v1893, 2
      %v1991 = vsel %vm1745, %v1988, %v1990
      %v1992 = vrot.slane %v1894, 2
      %v1993 = vrot.slane %v1895, 2
      %v1994 = vsel %vm1745, %v1992, %v1993
      %v1995 = vrot.slane %v1896, 2
      %v1996 = vsel %vm1745, %v1993, %v1995
      %v1997 = vrot.slane %v1897, 2
      %v1998 = vrot.slane %v1898, 2
      %v1999 = vsel %vm1745, %v1997, %v1998
      %v2000 = vrot.slane %v1899, 2
      %v2001 = vsel %vm1745, %v1998, %v2000
      %v2002 = vrot.slane %v1900, 2
      %v2003 = vrot.slane %v1901, 2
      %v2004 = vsel %vm1745, %v2002, %v2003
      %v2005 = vrot.slane %v1902, 2
      %v2006 = vsel %vm1745, %v2003, %v2005
      %v2007 = vrot.slane %v1903, 2
      %v2008 = vrot.slane %v1904, 2
      %v2009 = vsel %vm1745, %v2007, %v2008
      %v2010 = vrot.slane %v1905, 2
      %v2011 = vsel %vm1745, %v2008, %v2010
      %v2012 = vrot.slane %v1906, 2
      %v2013 = vrot.slane %v1907, 2
      %v2014 = vsel %vm1745, %v2012, %v2013
      %v2015 = vrot.slane %v1908, 2
      %v2016 = vsel %vm1745, %v2013, %v2015
      %v2017 = vrot.slane %v1909, 2
      %v2018 = vrot.slane %v1910, 2
      %v2019 = vsel %vm1745, %v2017, %v2018
      %v2020 = vrot.slane %v1911, 2
      %v2021 = vsel %vm1745, %v2018, %v2020
      %v2022 = vrot.slane %v1912, 2
      %v2023 = vrot.slane %v1913, 2
      %v2024 = vsel %vm1745, %v2022, %v2023
      %v2025 = vrot.slane %v1914, 2
      %v2026 = vsel %vm1745, %v2023, %v2025
      %v2027 = vrot.slane %v1915, 2
      %v2028 = vrot.slane %v1916, 2
      %v2029 = vsel %vm1745, %v2027, %v2028
      %v2030 = vrot.slane %v1917, 2
      %v2031 = vsel %vm1745, %v2028, %v2030
      %v2032 = vrot.slane %v1918, 2
      %v2033 = vrot.slane %v1919, 2
      %v2034 = vsel %vm1745, %v2032, %v2033
      %v2035 = vrot.slane %v1920, 2
      %v2036 = vsel %vm1745, %v2033, %v2035
      %v2037 = vrot.slane %v1921, 2
      %v2038 = vrot.slane %v1922, 2
      %v2039 = vsel %vm1745, %v2037, %v2038
      %v2040 = vrot.slane %v1923, 2
      %v2041 = vsel %vm1745, %v2038, %v2040
      %v2042 = vrot.slane %v1924, 2
      %v2043 = vrot.slane %v1925, 2
      %v2044 = vsel %vm1745, %v2042, %v2043
      %v2045 = vrot.slane %v1926, 2
      %v2046 = vsel %vm1745, %v2043, %v2045
      %v2047 = vrot.slane %v1927, 2
      %v2048 = vrot.slane %v1928, 2
      %v2049 = vsel %vm1745, %v2047, %v2048
      %v2050 = vrot.slane %v1929, 2
      %v2051 = vsel %vm1745, %v2048, %v2050
      %v2052 = vrot.slane %v1930, 2
      %v2053 = vrot.slane %v1931, 2
      %v2054 = vsel %vm1745, %v2052, %v2053
      %v2055 = vrot.slane %v1932, 2
      %v2056 = vsel %vm1745, %v2053, %v2055
      %v2057 = vrot.slane %v1933, 2
      %v2058 = vrot.slane %v1934, 2
      %v2059 = vsel %vm1745, %v2057, %v2058
      %v2060 = vrot.slane %v1935, 2
      %v2061 = vsel %vm1745, %v2058, %v2060
      %v2062 = vrot.slane %v1936, 2
      %v2063 = vrot.slane %v1937, 2
      %v2064 = vsel %vm1745, %v2062, %v2063
      %v2065 = vrot.slane %v1938, 2
      %v2066 = vsel %vm1745, %v2063, %v2065
      %v2099 = vadd.f32 %v1858, %v1989
      %v2100 = vadd.f32 %v1859, %v1991
      %v2101 = vadd.f32 %v1860, %v1994
      %v2102 = vadd.f32 %v1861, %v1996
      %v2103 = vadd.f32 %v1862, %v1999
      %v2104 = vadd.f32 %v1863, %v2001
      %v2105 = vadd.f32 %v1864, %v2004
      %v2106 = vadd.f32 %v1865, %v2006
      %v2107 = vadd.f32 %v1866, %v2009
      %v2108 = vadd.f32 %v1867, %v2011
      %v2109 = vadd.f32 %v1868, %v2014
      %v2110 = vadd.f32 %v1869, %v2016
      %v2111 = vadd.f32 %v1870, %v2019
      %v2112 = vadd.f32 %v1871, %v2021
      %v2113 = vadd.f32 %v1872, %v2024
      %v2114 = vadd.f32 %v1873, %v2026
      %v2115 = vadd.f32 %v1874, %v2029
      %v2116 = vadd.f32 %v1875, %v2031
      %v2117 = vadd.f32 %v1876, %v2034
      %v2118 = vadd.f32 %v1877, %v2036
      %v2119 = vadd.f32 %v1878, %v2039
      %v2120 = vadd.f32 %v1879, %v2041
      %v2121 = vadd.f32 %v1880, %v2044
      %v2122 = vadd.f32 %v1881, %v2046
      %v2123 = vadd.f32 %v1882, %v2049
      %v2124 = vadd.f32 %v1883, %v2051
      %v2125 = vadd.f32 %v1884, %v2054
      %v2126 = vadd.f32 %v1885, %v2056
      %v2127 = vadd.f32 %v1886, %v2059
      %v2128 = vadd.f32 %v1887, %v2061
      %v2129 = vadd.f32 %v1888, %v2064
      %v2130 = vadd.f32 %v1889, %v2066
      %v2131 = vperm.slane %v724, 0
      %v2132 = vmul.f32 %v675, %v2131
      %v2133 = vmul.f32 %v676, %v2131
      %v2134 = vmul.f32 %v677, %v2131
      %v2135 = vmul.f32 %v678, %v2131
      %v2136 = vmul.f32 %v679, %v2131
      %v2137 = vmul.f32 %v680, %v2131
      %v2138 = vmul.f32 %v681, %v2131
      %v2139 = vmul.f32 %v682, %v2131
      %v2140 = vmul.f32 %v683, %v2131
      %v2141 = vmul.f32 %v684, %v2131
      %v2142 = vmul.f32 %v685, %v2131
      %v2143 = vmul.f32 %v686, %v2131
      %v2144 = vmul.f32 %v687, %v2131
      %v2145 = vmul.f32 %v688, %v2131
      %v2146 = vmul.f32 %v689, %v2131
      %v2147 = vmul.f32 %v690, %v2131
      %v2148 = vmul.f32 %v691, %v2131
      %v2149 = vmul.f32 %v692, %v2131
      %v2150 = vmul.f32 %v693, %v2131
      %v2151 = vmul.f32 %v694, %v2131
      %v2152 = vmul.f32 %v695, %v2131
      %v2153 = vmul.f32 %v696, %v2131
      %v2154 = vmul.f32 %v697, %v2131
      %v2155 = vmul.f32 %v698, %v2131
      %v2156 = vmul.f32 %v699, %v2131
      %v2157 = vmul.f32 %v700, %v2131
      %v2158 = vmul.f32 %v701, %v2131
      %v2159 = vmul.f32 %v702, %v2131
      %v2160 = vmul.f32 %v703, %v2131
      %v2161 = vmul.f32 %v704, %v2131
      %v2162 = vmul.f32 %v705, %v2131
      %v2163 = vmul.f32 %v706, %v2131
      %v2164 = vmul.f32 %v707, %v2131
      %v2165 = vmul.f32 %v708, %v2131
      %v2166 = vmul.f32 %v709, %v2131
      %v2167 = vmul.f32 %v710, %v2131
      %v2168 = vmul.f32 %v711, %v2131
      %v2169 = vmul.f32 %v712, %v2131
      %v2170 = vmul.f32 %v713, %v2131
      %v2171 = vmul.f32 %v714, %v2131
      %v2172 = vmul.f32 %v715, %v2131
      %v2173 = vmul.f32 %v716, %v2131
      %v2174 = vmul.f32 %v717, %v2131
      %v2175 = vmul.f32 %v718, %v2131
      %v2176 = vmul.f32 %v719, %v2131
      %v2177 = vmul.f32 %v720, %v2131
      %v2178 = vmul.f32 %v721, %v2131
      %v2179 = vmul.f32 %v722, %v2131
      %v2228 = vrot.slane %v2132, 2
      %v2229 = vrot.slane %v2133, 2
      %v2230 = vsel %vm1745, %v2228, %v2229
      %v2231 = vrot.slane %v2134, 2
      %v2232 = vsel %vm1745, %v2229, %v2231
      %v2233 = vrot.slane %v2135, 2
      %v2234 = vrot.slane %v2136, 2
      %v2235 = vsel %vm1745, %v2233, %v2234
      %v2236 = vrot.slane %v2137, 2
      %v2237 = vsel %vm1745, %v2234, %v2236
      %v2238 = vrot.slane %v2138, 2
      %v2239 = vrot.slane %v2139, 2
      %v2240 = vsel %vm1745, %v2238, %v2239
      %v2241 = vrot.slane %v2140, 2
      %v2242 = vsel %vm1745, %v2239, %v2241
      %v2243 = vrot.slane %v2141, 2
      %v2244 = vrot.slane %v2142, 2
      %v2245 = vsel %vm1745, %v2243, %v2244
      %v2246 = vrot.slane %v2143, 2
      %v2247 = vsel %vm1745, %v2244, %v2246
      %v2248 = vrot.slane %v2144, 2
      %v2249 = vrot.slane %v2145, 2
      %v2250 = vsel %vm1745, %v2248, %v2249
      %v2251 = vrot.slane %v2146, 2
      %v2252 = vsel %vm1745, %v2249, %v2251
      %v2253 = vrot.slane %v2147, 2
      %v2254 = vrot.slane %v2148, 2
      %v2255 = vsel %vm1745, %v2253, %v2254
      %v2256 = vrot.slane %v2149, 2
      %v2257 = vsel %vm1745, %v2254, %v2256
      %v2258 = vrot.slane %v2150, 2
      %v2259 = vrot.slane %v2151, 2
      %v2260 = vsel %vm1745, %v2258, %v2259
      %v2261 = vrot.slane %v2152, 2
      %v2262 = vsel %vm1745, %v2259, %v2261
      %v2263 = vrot.slane %v2153, 2
      %v2264 = vrot.slane %v2154, 2
      %v2265 = vsel %vm1745, %v2263, %v2264
      %v2266 = vrot.slane %v2155, 2
      %v2267 = vsel %vm1745, %v2264, %v2266
      %v2268 = vrot.slane %v2156, 2
      %v2269 = vrot.slane %v2157, 2
      %v2270 = vsel %vm1745, %v2268, %v2269
      %v2271 = vrot.slane %v2158, 2
      %v2272 = vsel %vm1745, %v2269, %v2271
      %v2273 = vrot.slane %v2159, 2
      %v2274 = vrot.slane %v2160, 2
      %v2275 = vsel %vm1745, %v2273, %v2274
      %v2276 = vrot.slane %v2161, 2
      %v2277 = vsel %vm1745, %v2274, %v2276
      %v2278 = vrot.slane %v2162, 2
      %v2279 = vrot.slane %v2163, 2
      %v2280 = vsel %vm1745, %v2278, %v2279
      %v2281 = vrot.slane %v2164, 2
      %v2282 = vsel %vm1745, %v2279, %v2281
      %v2283 = vrot.slane %v2165, 2
      %v2284 = vrot.slane %v2166, 2
      %v2285 = vsel %vm1745, %v2283, %v2284
      %v2286 = vrot.slane %v2167, 2
      %v2287 = vsel %vm1745, %v2284, %v2286
      %v2288 = vrot.slane %v2168, 2
      %v2289 = vrot.slane %v2169, 2
      %v2290 = vsel %vm1745, %v2288, %v2289
      %v2291 = vrot.slane %v2170, 2
      %v2292 = vsel %vm1745, %v2289, %v2291
      %v2293 = vrot.slane %v2171, 2
      %v2294 = vrot.slane %v2172, 2
      %v2295 = vsel %vm1745, %v2293, %v2294
      %v2296 = vrot.slane %v2173, 2
      %v2297 = vsel %vm1745, %v2294, %v2296
      %v2298 = vrot.slane %v2174, 2
      %v2299 = vrot.slane %v2175, 2
      %v2300 = vsel %vm1745, %v2298, %v2299
      %v2301 = vrot.slane %v2176, 2
      %v2302 = vsel %vm1745, %v2299, %v2301
      %v2303 = vrot.slane %v2177, 2
      %v2304 = vrot.slane %v2178, 2
      %v2305 = vsel %vm1745, %v2303, %v2304
      %v2306 = vrot.slane %v2179, 2
      %v2307 = vsel %vm1745, %v2304, %v2306
      %v2340 = vadd.f32 %v2099, %v2230
      %v2341 = vadd.f32 %v2100, %v2232
      %v2342 = vadd.f32 %v2101, %v2235
      %v2343 = vadd.f32 %v2102, %v2237
      %v2344 = vadd.f32 %v2103, %v2240
      %v2345 = vadd.f32 %v2104, %v2242
      %v2346 = vadd.f32 %v2105, %v2245
      %v2347 = vadd.f32 %v2106, %v2247
      %v2348 = vadd.f32 %v2107, %v2250
      %v2349 = vadd.f32 %v2108, %v2252
      %v2350 = vadd.f32 %v2109, %v2255
      %v2351 = vadd.f32 %v2110, %v2257
      %v2352 = vadd.f32 %v2111, %v2260
      %v2353 = vadd.f32 %v2112, %v2262
      %v2354 = vadd.f32 %v2113, %v2265
      %v2355 = vadd.f32 %v2114, %v2267
      %v2356 = vadd.f32 %v2115, %v2270
      %v2357 = vadd.f32 %v2116, %v2272
      %v2358 = vadd.f32 %v2117, %v2275
      %v2359 = vadd.f32 %v2118, %v2277
      %v2360 = vadd.f32 %v2119, %v2280
      %v2361 = vadd.f32 %v2120, %v2282
      %v2362 = vadd.f32 %v2121, %v2285
      %v2363 = vadd.f32 %v2122, %v2287
      %v2364 = vadd.f32 %v2123, %v2290
      %v2365 = vadd.f32 %v2124, %v2292
      %v2366 = vadd.f32 %v2125, %v2295
      %v2367 = vadd.f32 %v2126, %v2297
      %v2368 = vadd.f32 %v2127, %v2300
      %v2369 = vadd.f32 %v2128, %v2302
      %v2370 = vadd.f32 %v2129, %v2305
      %v2371 = vadd.f32 %v2130, %v2307
      %v2372 = vmax.f32 %v2340, 0.0
      %v2373 = vmax.f32 %v2341, 0.0
      %v2374 = vmax.f32 %v2342, 0.0
      %v2375 = vmax.f32 %v2343, 0.0
      %v2376 = vmax.f32 %v2344, 0.0
      %v2377 = vmax.f32 %v2345, 0.0
      %v2378 = vmax.f32 %v2346, 0.0
      %v2379 = vmax.f32 %v2347, 0.0
      %v2380 = vmax.f32 %v2348, 0.0
      %v2381 = vmax.f32 %v2349, 0.0
      %v2382 = vmax.f32 %v2350, 0.0
      %v2383 = vmax.f32 %v2351, 0.0
      %v2384 = vmax.f32 %v2352, 0.0
      %v2385 = vmax.f32 %v2353, 0.0
      %v2386 = vmax.f32 %v2354, 0.0
      %v2387 = vmax.f32 %v2355, 0.0
      %v2388 = vmax.f32 %v2356, 0.0
      %v2389 = vmax.f32 %v2357, 0.0
      %v2390 = vmax.f32 %v2358, 0.0
      %v2391 = vmax.f32 %v2359, 0.0
      %v2392 = vmax.f32 %v2360, 0.0
      %v2393 = vmax.f32 %v2361, 0.0
      %v2394 = vmax.f32 %v2362, 0.0
      %v2395 = vmax.f32 %v2363, 0.0
      %v2396 = vmax.f32 %v2364, 0.0
      %v2397 = vmax.f32 %v2365, 0.0
      %v2398 = vmax.f32 %v2366, 0.0
      %v2399 = vmax.f32 %v2367, 0.0
      %v2400 = vmax.f32 %v2368, 0.0
      %v2401 = vmax.f32 %v2369, 0.0
      %v2402 = vmax.f32 %v2370, 0.0
      %v2403 = vmax.f32 %v2371, 0.0
      %v2404 = vmin.f32 %v2372, 6.0
      %v2405 = vmin.f32 %v2373, 6.0
      %v2406 = vmin.f32 %v2374, 6.0
      %v2407 = vmin.f32 %v2375, 6.0
      %v2408 = vmin.f32 %v2376, 6.0
      %v2409 = vmin.f32 %v2377, 6.0
      %v2410 = vmin.f32 %v2378, 6.0
      %v2411 = vmin.f32 %v2379, 6.0
      %v2412 = vmin.f32 %v2380, 6.0
      %v2413 = vmin.f32 %v2381, 6.0
      %v2414 = vmin.f32 %v2382, 6.0
      %v2415 = vmin.f32 %v2383, 6.0
      %v2416 = vmin.f32 %v2384, 6.0
      %v2417 = vmin.f32 %v2385, 6.0
      %v2418 = vmin.f32 %v2386, 6.0
      %v2419 = vmin.f32 %v2387, 6.0
      %v2420 = vmin.f32 %v2388, 6.0
      %v2421 = vmin.f32 %v2389, 6.0
      %v2422 = vmin.f32 %v2390, 6.0
      %v2423 = vmin.f32 %v2391, 6.0
      %v2424 = vmin.f32 %v2392, 6.0
      %v2425 = vmin.f32 %v2393, 6.0
      %v2426 = vmin.f32 %v2394, 6.0
      %v2427 = vmin.f32 %v2395, 6.0
      %v2428 = vmin.f32 %v2396, 6.0
      %v2429 = vmin.f32 %v2397, 6.0
      %v2430 = vmin.f32 %v2398, 6.0
      %v2431 = vmin.f32 %v2399, 6.0
      %v2432 = vmin.f32 %v2400, 6.0
      %v2433 = vmin.f32 %v2401, 6.0
      %v2434 = vmin.f32 %v2402, 6.0
      %v2435 = vmin.f32 %v2403, 6.0
      %v2436 = vld [vmem:[%s5] sm:$0xff]
      %v2437 = vld [vmem:[%s5 + $0x8] sm:$0xff]
      %v2438 = vld [vmem:[%s5 + $0x10] sm:$0xff]
      %v2439 = vld [vmem:[%s5 + $0x18] sm:$0xff]
      %v2440 = vld [vmem:[%s6] sm:$0x1]
      %v2442 = vperm.slane %v2440, 0
      %v2445 = vsel %vm590, %v2404, 0
      %v2448 = vsel %vm590, %v2405, 0
      %v2451 = vsel %vm590, %v2406, 0
      %v2454 = vsel %vm590, %v2407, 0
      %v2457 = vsel %vm590, %v2408, 0
      %v2460 = vsel %vm590, %v2409, 0
      %v2463 = vsel %vm590, %v2410, 0
      %v2466 = vsel %vm590, %v2411, 0
      %v2469 = vsel %vm590, %v2412, 0
      %v2472 = vsel %vm590, %v2413, 0
      %v2475 = vsel %vm590, %v2414, 0
      %v2478 = vsel %vm590, %v2415, 0
      %v2481 = vsel %vm590, %v2416, 0
      %v2484 = vsel %vm590, %v2417, 0
      %v2487 = vsel %vm590, %v2418, 0
      %v2490 = vsel %vm590, %v2419, 0
      %v2493 = vsel %vm590, %v2420, 0
      %v2496 = vsel %vm590, %v2421, 0
      %v2499 = vsel %vm590, %v2422, 0
      %v2502 = vsel %vm590, %v2423, 0
      %v2505 = vsel %vm590, %v2424, 0
      %v2508 = vsel %vm590, %v2425, 0
      %v2511 = vsel %vm590, %v2426, 0
      %v2514 = vsel %vm590, %v2427, 0
      %v2517 = vsel %vm590, %v2428, 0
      %v2520 = vsel %vm590, %v2429, 0
      %v2523 = vsel %vm590, %v2430, 0
      %v2526 = vsel %vm590, %v2431, 0
      %v2529 = vsel %vm590, %v2432, 0
      %v2532 = vsel %vm590, %v2433, 0
      %v2535 = vsel %vm590, %v2434, 0
      %v2538 = vsel %vm590, %v2435, 0
      %2540 = vmatpush.msra.mxu0 0.0
      %2541 = vmatpush.msra.mxu0 0.0
      %2542 = vmatpush.msra.mxu0 0.0
      %2543 = vmatpush.msra.mxu0 0.0
      %2544 = vmatpush.msra.mxu0 0.0
      %2545 = vmatpush.msra.mxu0 0.0
      %2546 = vmatpush.msra.mxu0 0.0
      %2547 = vmatpush.msra.mxu0 0.0
      %2548 = vmatpush.msra.mxu0 0.0
      %2549 = vmatpush.msra.mxu0 0.0
      %2550 = vmatpush.msra.mxu0 0.0
      %2551 = vmatpush.msra.mxu0 0.0
      %2552 = vmatpush.msra.mxu0 %v2439
      %2553 = vmatpush.msra.mxu0 %v2438
      %2554 = vmatpush.msra.mxu0 %v2437
      %2555 = vmatpush.msra.mxu0 %v2436
      %2556 = vmatmul.f32.gmra.mxu0 %v2445
      %v2557 = vpop.f32.mrf.mxu0
      %v2558 = vadd.f32 %v2442, %v2557
      %2559 = vmatmul.f32.gmra.mxu0 %v2448
      %v2560 = vpop.f32.mrf.mxu0
      %v2561 = vadd.f32 %v2442, %v2560
      %2562 = vmatmul.f32.gmra.mxu0 %v2451
      %v2563 = vpop.f32.mrf.mxu0
      %v2564 = vadd.f32 %v2442, %v2563
      %2565 = vmatmul.f32.gmra.mxu0 %v2454
      %v2566 = vpop.f32.mrf.mxu0
      %v2567 = vadd.f32 %v2442, %v2566
      %2568 = vmatmul.f32.gmra.mxu0 %v2457
      %v2569 = vpop.f32.mrf.mxu0
      %v2570 = vadd.f32 %v2442, %v2569
      %2571 = vmatmul.f32.gmra.mxu0 %v2460
      %v2572 = vpop.f32.mrf.mxu0
      %v2573 = vadd.f32 %v2442, %v2572
      %2574 = vmatmul.f32.gmra.mxu0 %v2463
      %v2575 = vpop.f32.mrf.mxu0
      %v2576 = vadd.f32 %v2442, %v2575
      %2577 = vmatmul.f32.gmra.mxu0 %v2466
      %v2578 = vpop.f32.mrf.mxu0
      %v2579 = vadd.f32 %v2442, %v2578
      %2580 = vmatmul.f32.gmra.mxu0 %v2469
      %v2581 = vpop.f32.mrf.mxu0
      %v2582 = vadd.f32 %v2442, %v2581
      %2583 = vmatmul.f32.gmra.mxu0 %v2472
      %v2584 = vpop.f32.mrf.mxu0
      %v2585 = vadd.f32 %v2442, %v2584
      %2586 = vmatmul.f32.gmra.mxu0 %v2475
      %v2587 = vpop.f32.mrf.mxu0
      %v2588 = vadd.f32 %v2442, %v2587
      %2589 = vmatmul.f32.gmra.mxu0 %v2478
      %v2590 = vpop.f32.mrf.mxu0
      %v2591 = vadd.f32 %v2442, %v2590
      %2592 = vmatmul.f32.gmra.mxu0 %v2481
      %v2593 = vpop.f32.mrf.mxu0
      %v2594 = vadd.f32 %v2442, %v2593
      %2595 = vmatmul.f32.gmra.mxu0 %v2484
      %v2596 = vpop.f32.mrf.mxu0
      %v2597 = vadd.f32 %v2442, %v2596
      %2598 = vmatmul.f32.gmra.mxu0 %v2487
      %v2599 = vpop.f32.mrf.mxu0
      %v2600 = vadd.f32 %v2442, %v2599
      %2601 = vmatmul.f32.gmra.mxu0 %v2490
      %v2602 = vpop.f32.mrf.mxu0
      %v2603 = vadd.f32 %v2442, %v2602
      %2604 = vmatmul.f32.gmra.mxu0 %v2493
      %v2605 = vpop.f32.mrf.mxu0
      %v2606 = vadd.f32 %v2442, %v2605
      %2607 = vmatmul.f32.gmra.mxu0 %v2496
      %v2608 = vpop.f32.mrf.mxu0
      %v2609 = vadd.f32 %v2442, %v2608
      %2610 = vmatmul.f32.gmra.mxu0 %v2499
      %v2611 = vpop.f32.mrf.mxu0
      %v2612 = vadd.f32 %v2442, %v2611
      %2613 = vmatmul.f32.gmra.mxu0 %v2502
      %v2614 = vpop.f32.mrf.mxu0
      %v2615 = vadd.f32 %v2442, %v2614
      %2616 = vmatmul.f32.gmra.mxu0 %v2505
      %v2617 = vpop.f32.mrf.mxu0
      %v2618 = vadd.f32 %v2442, %v2617
      %2619 = vmatmul.f32.gmra.mxu0 %v2508
      %v2620 = vpop.f32.mrf.mxu0
      %v2621 = vadd.f32 %v2442, %v2620
      %2622 = vmatmul.f32.gmra.mxu0 %v2511
      %v2623 = vpop.f32.mrf.mxu0
      %v2624 = vadd.f32 %v2442, %v2623
      %2625 = vmatmul.f32.gmra.mxu0 %v2514
      %v2626 = vpop.f32.mrf.mxu0
      %v2627 = vadd.f32 %v2442, %v2626
      %2628 = vmatmul.f32.gmra.mxu0 %v2517
      %v2629 = vpop.f32.mrf.mxu0
      %v2630 = vadd.f32 %v2442, %v2629
      %2631 = vmatmul.f32.gmra.mxu0 %v2520
      %v2632 = vpop.f32.mrf.mxu0
      %v2633 = vadd.f32 %v2442, %v2632
      %2634 = vmatmul.f32.gmra.mxu0 %v2523
      %v2635 = vpop.f32.mrf.mxu0
      %v2636 = vadd.f32 %v2442, %v2635
      %2637 = vmatmul.f32.gmra.mxu0 %v2526
      %v2638 = vpop.f32.mrf.mxu0
      %v2639 = vadd.f32 %v2442, %v2638
      %2640 = vmatmul.f32.gmra.mxu0 %v2529
      %v2641 = vpop.f32.mrf.mxu0
      %v2642 = vadd.f32 %v2442, %v2641
      %2643 = vmatmul.f32.gmra.mxu0 %v2532
      %v2644 = vpop.f32.mrf.mxu0
      %v2645 = vadd.f32 %v2442, %v2644
      %2646 = vmatmul.f32.gmra.mxu0 %v2535
      %v2647 = vpop.f32.mrf.mxu0
      %v2648 = vadd.f32 %v2442, %v2647
      %2649 = vmatmul.f32.gmra.mxu0 %v2538
      %v2650 = vpop.f32.mrf.mxu0
      %v2651 = vadd.f32 %v2442, %v2650
      %2652 = vdwg.mxu0
      %v2653 = vmax.f32 %v2558, 0.0
      %v2654 = vmax.f32 %v2561, 0.0
      %v2655 = vmax.f32 %v2564, 0.0
      %v2656 = vmax.f32 %v2567, 0.0
      %v2657 = vmax.f32 %v2570, 0.0
      %v2658 = vmax.f32 %v2573, 0.0
      %v2659 = vmax.f32 %v2576, 0.0
      %v2660 = vmax.f32 %v2579, 0.0
      %v2661 = vmax.f32 %v2582, 0.0
      %v2662 = vmax.f32 %v2585, 0.0
      %v2663 = vmax.f32 %v2588, 0.0
      %v2664 = vmax.f32 %v2591, 0.0
      %v2665 = vmax.f32 %v2594, 0.0
      %v2666 = vmax.f32 %v2597, 0.0
      %v2667 = vmax.f32 %v2600, 0.0
      %v2668 = vmax.f32 %v2603, 0.0
      %v2669 = vmax.f32 %v2606, 0.0
      %v2670 = vmax.f32 %v2609, 0.0
      %v2671 = vmax.f32 %v2612, 0.0
      %v2672 = vmax.f32 %v2615, 0.0
      %v2673 = vmax.f32 %v2618, 0.0
      %v2674 = vmax.f32 %v2621, 0.0
      %v2675 = vmax.f32 %v2624, 0.0
      %v2676 = vmax.f32 %v2627, 0.0
      %v2677 = vmax.f32 %v2630, 0.0
      %v2678 = vmax.f32 %v2633, 0.0
      %v2679 = vmax.f32 %v2636, 0.0
      %v2680 = vmax.f32 %v2639, 0.0
      %v2681 = vmax.f32 %v2642, 0.0
      %v2682 = vmax.f32 %v2645, 0.0
      %v2683 = vmax.f32 %v2648, 0.0
      %v2684 = vmax.f32 %v2651, 0.0
      %v2685 = vmin.f32 %v2653, 6.0
      %v2686 = vmin.f32 %v2654, 6.0
      %v2687 = vmin.f32 %v2655, 6.0
      %v2688 = vmin.f32 %v2656, 6.0
      %v2689 = vmin.f32 %v2657, 6.0
      %v2690 = vmin.f32 %v2658, 6.0
      %v2691 = vmin.f32 %v2659, 6.0
      %v2692 = vmin.f32 %v2660, 6.0
      %v2693 = vmin.f32 %v2661, 6.0
      %v2694 = vmin.f32 %v2662, 6.0
      %v2695 = vmin.f32 %v2663, 6.0
      %v2696 = vmin.f32 %v2664, 6.0
      %v2697 = vmin.f32 %v2665, 6.0
      %v2698 = vmin.f32 %v2666, 6.0
      %v2699 = vmin.f32 %v2667, 6.0
      %v2700 = vmin.f32 %v2668, 6.0
      %v2701 = vmin.f32 %v2669, 6.0
      %v2702 = vmin.f32 %v2670, 6.0
      %v2703 = vmin.f32 %v2671, 6.0
      %v2704 = vmin.f32 %v2672, 6.0
      %v2705 = vmin.f32 %v2673, 6.0
      %v2706 = vmin.f32 %v2674, 6.0
      %v2707 = vmin.f32 %v2675, 6.0
      %v2708 = vmin.f32 %v2676, 6.0
      %v2709 = vmin.f32 %v2677, 6.0
      %v2710 = vmin.f32 %v2678, 6.0
      %v2711 = vmin.f32 %v2679, 6.0
      %v2712 = vmin.f32 %v2680, 6.0
      %v2713 = vmin.f32 %v2681, 6.0
      %v2714 = vmin.f32 %v2682, 6.0
      %v2715 = vmin.f32 %v2683, 6.0
      %v2716 = vmin.f32 %v2684, 6.0
      %2717 = vst.msk [vmem:[%s278] sm:$0xff] %vm316, %v2685
      %2718 = vst.msk [vmem:[%s278 + $0x8] sm:$0xff] %vm316, %v2686
      %2719 = vst.msk [vmem:[%s278 + $0x10] sm:$0xff] %vm316, %v2687
      %2720 = vst.msk [vmem:[%s278 + $0x18] sm:$0xff] %vm316, %v2688
      %2721 = vst.msk [vmem:[%s278 + $0x20] sm:$0xff] %vm316, %v2689
      %2722 = vst.msk [vmem:[%s278 + $0x28] sm:$0xff] %vm316, %v2690
      %2723 = vst.msk [vmem:[%s278 + $0x30] sm:$0xff] %vm316, %v2691
      %2724 = vst.msk [vmem:[%s278 + $0x38] sm:$0xff] %vm316, %v2692
      %2725 = vst.msk [vmem:[%s278 + $0x40] sm:$0xff] %vm316, %v2693
      %2726 = vst.msk [vmem:[%s278 + $0x48] sm:$0xff] %vm316, %v2694
      %2727 = vst.msk [vmem:[%s278 + $0x50] sm:$0xff] %vm316, %v2695
      %2728 = vst.msk [vmem:[%s278 + $0x58] sm:$0xff] %vm316, %v2696
      %2729 = vst.msk [vmem:[%s278 + $0x60] sm:$0xff] %vm316, %v2697
      %2730 = vst.msk [vmem:[%s278 + $0x68] sm:$0xff] %vm316, %v2698
      %2731 = vst.msk [vmem:[%s278 + $0x70] sm:$0xff] %vm316, %v2699
      %2732 = vst.msk [vmem:[%s278 + $0x78] sm:$0xff] %vm316, %v2700
      %2733 = vst.msk [vmem:[%s278 + $0x80] sm:$0xff] %vm316, %v2701
      %2734 = vst.msk [vmem:[%s278 + $0x88] sm:$0xff] %vm316, %v2702
      %2735 = vst.msk [vmem:[%s278 + $0x90] sm:$0xff] %vm316, %v2703
      %2736 = vst.msk [vmem:[%s278 + $0x98] sm:$0xff] %vm316, %v2704
      %2737 = vst.msk [vmem:[%s278 + $0xa0] sm:$0xff] %vm316, %v2705
      %2738 = vst.msk [vmem:[%s278 + $0xa8] sm:$0xff] %vm316, %v2706
      %2739 = vst.msk [vmem:[%s278 + $0xb0] sm:$0xff] %vm316, %v2707
      %2740 = vst.msk [vmem:[%s278 + $0xb8] sm:$0xff] %vm316, %v2708
      %2741 = vst.msk [vmem:[%s278 + $0xc0] sm:$0xff] %vm316, %v2709
      %2742 = vst.msk [vmem:[%s278 + $0xc8] sm:$0xff] %vm316, %v2710
      %2743 = vst.msk [vmem:[%s278 + $0xd0] sm:$0xff] %vm316, %v2711
      %2744 = vst.msk [vmem:[%s278 + $0xd8] sm:$0xff] %vm316, %v2712
      %2745 = vst.msk [vmem:[%s278 + $0xe0] sm:$0xff] %vm316, %v2713
      %2746 = vst.msk [vmem:[%s278 + $0xe8] sm:$0xff] %vm316, %v2714
      %2747 = vst.msk [vmem:[%s278 + $0xf0] sm:$0xff] %vm316, %v2715
      %2748 = vst.msk [vmem:[%s278 + $0xf8] sm:$0xff] %vm316, %v2716
      %p2749 = scmp.lt.s32.totalorder %s18, 1
      %s2750 = scalar_select %p2749, %s18, 1
      %s2751 = smul.addr %s2750, 32
      %s2752 = smul.addr %s2751, 8
      %s2753 = scalar_lea.vmem %s7, %s2752
      // Predicated region
      $region49: #{tpu_custom_call.1} parent=47 // pred_check
        %p2754 = pneg %p188
      $region50: #{tpu_custom_call.1} parent=47 // pred_check_branch
        %2756 = sbr.rel (%p2754) target = $region52
      $region51: #{tpu_custom_call.1} parent=47 // pred_region
        _
      $region52: #{tpu_custom_call.1} parent=47 // pred_fallthru
        _
    $region48: #{tpu_custom_call.1} parent=5 // pred_fallthru
      _
    %p2757 = scmp.le.s32.totalorder 2, %s13
    // Predicated region
    $region53: #{tpu_custom_call.1} parent=5 // pred_check
      %p2758 = pneg %p2757
    $region54: #{tpu_custom_call.1} parent=5 // pred_check_branch
      %2760 = sbr.rel (%p2758) target = $region56
    $region55: #{tpu_custom_call.1} parent=5 // pred_region
      %s2761 = ssub.s32 %s13, 2
      // Predicated region
      $region57: #{tpu_custom_call.1} parent=55 // pred_check
        %p2762 = pneg %p194
      $region58: #{tpu_custom_call.1} parent=55 // pred_check_branch
        %2764 = sbr.rel (%p2762) target = $region60
      $region59: #{tpu_custom_call.1} parent=55 // pred_region
        %p2765 = scmp.lt.s32.totalorder %s19, 1
        %s2766 = scalar_select %p2765, %s19, 1
        %s2767 = smul.addr %s2766, 32
        %s2768 = smul.addr %s2767, 8
        %s2769 = scalar_lea.vmem %s7, %s2768
      $region60: #{tpu_custom_call.1} parent=55 // pred_fallthru
        _
    $region56: #{tpu_custom_call.1} parent=5 // pred_fallthru
      _
  $region6: #{tpu_custom_call.1} parent=0 // loop_footer
    %s17 = sadd.s32 1, %s13
  $region7: #{tpu_custom_call.1} parent=0 // loop_footer_branch
    %12 = sbr.rel target = $region3
  $region8: #{tpu_custom_call.1} parent=0 // loop_exit
    _

</llo_original>
